<compile_context>
chip_gen: v6e
topology: v6e:2x2x1
jax: 0.10.0
libtpu: 0.0.40
codegen_flags: <defaults>
</compile_context>

<pallas_src>
import functools
import math

import jax
import jax.numpy as jnp
import numpy as np
from jax.experimental import pallas as pl
from jax.experimental.pallas import tpu as pltpu


# ------------------------------ kernel helpers ------------------------------

def _dot(a, b):
    return jnp.dot(a, b, preferred_element_type=jnp.float32)


def _bn_train(x):
    # BatchNorm1d, training-mode batch statistics, affine at init (gamma=1, beta=0).
    mean = jnp.mean(x, axis=0, keepdims=True)
    var = jnp.mean((x - mean) ** 2, axis=0, keepdims=True)   # biased var (PyTorch BN fwd)
    return (x - mean) * jax.lax.rsqrt(var + 1e-5)


def _modal_classifier(x, w1, b1, w2, b2, w3, b3):
    # ReverseLayerF is identity in forward.
    # BN(train) -> Linear+ReLU -> Linear+ReLU -> Linear -> softmax(dim=1)
    h = _bn_train(x)
    h = jnp.maximum(_dot(h, w1) + b1, 0.0)
    h = jnp.maximum(_dot(h, w2) + b2, 0.0)
    logits = _dot(h, w3) + b3
    m = jnp.max(logits, axis=1, keepdims=True)
    e = jnp.exp(logits - m)
    return e / jnp.sum(e, axis=1, keepdims=True)


# --------------------------------- the kernel --------------------------------

def _ussl_kernel(
    # --------------------------------- inputs --------------------------------
    img_ref, txt_ref,
    img_w_ref, img_b_ref, txt_w_ref, txt_b_ref,
    adj_ref, l_ada_ref, ml_adj_ref, ml_ada_ref, lml_ref,
    inp_ref, wl_ref, ml_train_ref, pad_rand_ref, gmask_ref,
    lrn_w_ref, hypo_w_ref, hypo_b_ref,
    ld_w1_ref, ld_b1_ref, ld_w2_ref, ld_b2_ref, ld_w3_ref, ld_b3_ref,
    mld_w1_ref, mld_b1_ref, mld_w2_ref, mld_b2_ref, mld_w3_ref, mld_b3_ref,
    # --------------------------------- outputs -------------------------------
    view1_ref, view2_ref, y_img_ref, y_text_ref,
    lin_l_ref, lin_ml_ref, y_l_ref, y_ml_ref, ml_adj_out_ref,
    *, beta, jieta,
):
    B = img_ref.shape[0]
    L = adj_ref.shape[0]          # num_classes == l_num
    M = ml_adj_ref.shape[0]       # ml_num
    N = L + M

    # ---- ImgNN / TextNN: BN(train stats) -> Linear -> ReLU ------------------
    view1 = jnp.maximum(_dot(_bn_train(img_ref[...]), img_w_ref[...]) + img_b_ref[...], 0.0)
    view2 = jnp.maximum(_dot(_bn_train(txt_ref[...]), txt_w_ref[...]) + txt_b_ref[...], 0.0)
    view1_ref[...] = view1
    view2_ref[...] = view2

    # ---- adjacency preprocessing (all resident in VMEM) ---------------------
    lael_ada = jnp.maximum(adj_ref[...] + beta * l_ada_ref[...], 0.0)        # (L, L)
    ml_lael_ada = jnp.maximum(ml_adj_ref[...] + jieta * ml_ada_ref[...], 0.0)  # (M, M)
    lml = lml_ref[...]                                                        # (L, M)

    inp = inp_ref[...]                                                        # (L, C)
    inp_ml = _dot(ml_train_ref[...], inp * wl_ref[...])                       # (M, C)

    lrn_w = lrn_w_ref[...]                                                    # (C, G)
    sup_inp = _dot(inp, lrn_w)                                                # (L, G)
    sup_inp_ml = _dot(inp_ml, lrn_w)                                          # (M, G)

    # ---- graph 1: label GCN --------------------------------------------------
    # A1 = [[lael_ada, lml], [1, 1]];   gen_adj(A)[i,j] = d[i] * A[j,i] * d[j],
    # d = rowsum(A)^-0.5;   label_A = gen_adj(A1)[:L];
    # final_l = label_A @ ([inp; inp_ml] @ lrn_w)  — decomposed into block
    # matmuls so A1 / label_A are never materialized.
    d1_top = jax.lax.rsqrt(jnp.sum(lael_ada, axis=1, keepdims=True)
                           + jnp.sum(lml, axis=1, keepdims=True))             # (L, 1)
    d1_bot = float(N) ** -0.5                                                 # ones rows sum to N
    final_l = d1_top * (_dot(lael_ada.T, d1_top * sup_inp)
                        + d1_bot * jnp.sum(sup_inp_ml, axis=0, keepdims=True))  # (L, G)

    # ---- graph 2: multi-label GCN --------------------------------------------
    # TODO(synk): split_and_keep_diagonal_blocks is not provided in the
    # reference; assumed semantics = keep the num_groups diagonal blocks of
    # ml_lael_ada (precomputed constant mask) and append lml.T on the right.
    blocked = ml_lael_ada * gmask_ref[...]                                    # (M, M)
    blocked_t = blocked.T
    lml_t = lml.T                                                             # (M, L)
    P = pad_rand_ref[...]                                                     # (L, M+L); stand-in for torch.rand
    d2_top = jax.lax.rsqrt(jnp.sum(blocked, axis=1, keepdims=True)
                           + jnp.sum(lml_t, axis=1, keepdims=True))           # (M, 1)
    d2_bot = jax.lax.rsqrt(jnp.sum(P, axis=1, keepdims=True))                 # (L, 1)
    p_left_t = P[:, :M].T                                                     # (M, L)
    final_ml = d2_top * (_dot(blocked_t, d2_top * sup_inp_ml)
                         + _dot(p_left_t, d2_bot * sup_inp))                  # (M, G)
    # final_ml_adj = ml_label_A[:, :M]:  [i, j] = d2[i] * blocked[j, i] * d2[j]
    ml_adj_out_ref[...] = d2_top * (d2_top * blocked).T

    # ---- hypo linear ----------------------------------------------------------
    hypo_w = hypo_w_ref[...]
    hypo_b = hypo_b_ref[...]
    lin_l = _dot(final_l, hypo_w) + hypo_b                                    # (L, mid)
    lin_ml = _dot(final_ml, hypo_w) + hypo_b                                  # (M, mid)
    lin_l_ref[...] = lin_l
    lin_ml_ref[...] = lin_ml

    # ---- cosine-style similarities: img & txt batched into one matmul ---------
    views = jnp.concatenate([view1, view2], axis=0)                           # (2B, mid)
    vnorm = jnp.sqrt(jnp.sum(views * views, axis=1, keepdims=True))           # (2B, 1)
    lin_l_t = lin_l.T                                                         # (mid, L)
    lnorm = jnp.sqrt(jnp.sum(lin_l_t * lin_l_t, axis=0, keepdims=True))       # (1, L)
    sim = _dot(views, lin_l_t)                                                # (2B, L)
    y = sim * pl.reciprocal(vnorm * lnorm + 1e-6, approx=True)
    y_img_ref[...] = y[:B, :]
    y_text_ref[...] = y[B:, :]

    # ---- modality discriminators (+ softmax) ----------------------------------
    y_l_ref[...] = _modal_classifier(lin_l,
                                     ld_w1_ref[...], ld_b1_ref[...],
                                     ld_w2_ref[...], ld_b2_ref[...],
                                     ld_w3_ref[...], ld_b3_ref[...])
    y_ml_ref[...] = _modal_classifier(lin_ml,
                                      mld_w1_ref[...], mld_b1_ref[...],
                                      mld_w2_ref[...], mld_b2_ref[...],
                                      mld_w3_ref[...], mld_b3_ref[...])


# ------------------------------- forward wrapper ------------------------------

def make_ussl_forward(*, beta, jieta):
    # TODO(synk): self.beta is referenced in forward() but never defined in the
    # PyTorch __init__; supplied here as a deterministic constant.
    kernel = functools.partial(_ussl_kernel, beta=float(beta), jieta=float(jieta))

    def forward(p, feature_img, feature_text):
        B = feature_img.shape[0]
        L = p["_adj"].shape[0]
        M = p["ml_adj"].shape[0]
        mid = p["img_w"].shape[1]
        out_shape = (
            jax.ShapeDtypeStruct((B, mid), jnp.float32),   # view1_feature
            jax.ShapeDtypeStruct((B, mid), jnp.float32),   # view2_feature
            jax.ShapeDtypeStruct((B, L), jnp.float32),     # y_img
            jax.ShapeDtypeStruct((B, L), jnp.float32),     # y_text
            jax.ShapeDtypeStruct((L, mid), jnp.float32),   # final_linear_l_feature
            jax.ShapeDtypeStruct((M, mid), jnp.float32),   # final_linear_ml_feature
            jax.ShapeDtypeStruct((L, 2), jnp.float32),     # y_l
            jax.ShapeDtypeStruct((M, 2), jnp.float32),     # y_ml
            jax.ShapeDtypeStruct((M, M), jnp.float32),     # final_ml_adj
        )
        return pl.pallas_call(
            kernel,
            out_shape=out_shape,
            compiler_params=pltpu.CompilerParams(vmem_limit_bytes=32 * 1024 * 1024),
        )(
            feature_img, feature_text,
            p["img_w"], p["img_b"], p["txt_w"], p["txt_b"],
            p["_adj"], p["l_ada"], p["ml_adj"], p["ml_ada"], p["lml_adj"],
            p["inp"], p["W_l"], p["ml_train"], p["paddings_rand"], p["group_mask"],
            p["lrn_w"], p["hypo_w"], p["hypo_b"],
            p["lD_w1"], p["lD_b1"], p["lD_w2"], p["lD_b2"], p["lD_w3"], p["lD_b3"],
            p["mlD_w1"], p["mlD_b1"], p["mlD_w2"], p["mlD_b2"], p["mlD_w3"], p["mlD_b3"],
        )

    return forward


# --------------------------------- parameters ---------------------------------

def _uniform(key, shape, bound):
    return jax.random.uniform(key, shape, jnp.float32, -bound, bound)


def init_ussl_params(key, *, img_dim, txt_dim, mid, num_classes, ml_num,
                     num_groups, in_channel, gcn_dim):
    l_num = num_classes
    ks = jax.random.split(key, 24)
    p = {}
    # ImgNN / TextNN linear layers (PyTorch default init bound = 1/sqrt(fan_in))
    p["img_w"] = _uniform(ks[0], (img_dim, mid), 1.0 / math.sqrt(img_dim))
    p["img_b"] = _uniform(ks[1], (1, mid), 1.0 / math.sqrt(img_dim))
    p["txt_w"] = _uniform(ks[2], (txt_dim, mid), 1.0 / math.sqrt(txt_dim))
    p["txt_b"] = _uniform(ks[3], (1, mid), 1.0 / math.sqrt(txt_dim))
    # GraphConvolution weight (stdv = 1/sqrt(out_features), no bias)
    p["lrn_w"] = _uniform(ks[4], (in_channel, gcn_dim), 1.0 / math.sqrt(gcn_dim))
    # hypo linear
    p["hypo_w"] = _uniform(ks[5], (gcn_dim, mid), 1.0 / math.sqrt(gcn_dim))
    p["hypo_b"] = _uniform(ks[6], (1, mid), 1.0 / math.sqrt(gcn_dim))
    # ModalClassifiers (mid -> mid//4 -> mid//16 -> 2)
    d1, d2 = mid // 4, mid // 16
    for name, base in (("lD", 7), ("mlD", 13)):
        p[f"{name}_w1"] = _uniform(ks[base + 0], (mid, d1), 1.0 / math.sqrt(mid))
        p[f"{name}_b1"] = _uniform(ks[base + 1], (1, d1), 1.0 / math.sqrt(mid))
        p[f"{name}_w2"] = _uniform(ks[base + 2], (d1, d2), 1.0 / math.sqrt(d1))
        p[f"{name}_b2"] = _uniform(ks[base + 3], (1, d2), 1.0 / math.sqrt(d1))
        p[f"{name}_w3"] = _uniform(ks[base + 4], (d2, 2), 1.0 / math.sqrt(d2))
        p[f"{name}_b3"] = _uniform(ks[base + 5], (1, 2), 1.0 / math.sqrt(d2))
    # Graph buffers / extra parameters
    kb = jax.random.split(ks[19], 8)
    # TODO(synk): gen_A(num_classes, t, adj_file) needs an adjacency file; a
    # deterministic synthetic non-negative adjacency with self-loops is used.
    p["_adj"] = (0.25 * (jax.random.uniform(kb[0], (l_num, l_num)) < 0.4).astype(jnp.float32)
                 + jnp.eye(l_num, dtype=jnp.float32))
    p["l_ada"] = 0.02 * jax.random.uniform(kb[1], (l_num, l_num), jnp.float32)
    p["ml_ada"] = 0.02 * jax.random.uniform(kb[2], (ml_num, ml_num), jnp.float32)
    p["ml_adj"] = jax.random.uniform(kb[3], (ml_num, ml_num), jnp.float32)
    p["lml_adj"] = jax.random.uniform(kb[4], (l_num, ml_num), jnp.float32)
    p["inp"] = jax.random.normal(kb[5], (l_num, in_channel), jnp.float32)
    # TODO(synk): W_l is an uninitialized torch.Tensor in the original; use a
    # deterministic uniform init here.
    p["W_l"] = jax.random.uniform(kb[6], (l_num, in_channel), jnp.float32)
    p["ml_train"] = (jax.random.uniform(kb[7], (ml_num, l_num)) < 0.5).astype(jnp.float32)
    # TODO(synk): deterministic stand-in for torch.rand paddings drawn inside forward.
    p["paddings_rand"] = jax.random.uniform(jax.random.fold_in(key, 999),
                                            (l_num, ml_num + l_num), jnp.float32)
    # Compile-time constant block-diagonal group mask (num_groups diagonal blocks).
    g = ml_num // num_groups
    ids = np.arange(ml_num) // g
    p["group_mask"] = jnp.asarray((ids[:, None] == ids[None, :]).astype(np.float32))
    return p


# ------------------------------------- main ------------------------------------

if __name__ == "__main__":
    # Small, self-consistent shapes (the "300"-dim GCN channel is shrunk to 16).
    batch = 8
    img_dim, txt_dim, mid = 32, 16, 32
    num_classes = 8          # == l_num
    ml_num = 16
    num_groups = 4
    in_channel = 16          # inp feature dim (stands in for 300)
    gcn_dim = 16             # GCN output dim (stands in for 300)
    beta, jieta = 0.5, 0.5

    key = jax.random.PRNGKey(0)
    k_param, k_img, k_txt = jax.random.split(key, 3)

    params = init_ussl_params(
        k_param, img_dim=img_dim, txt_dim=txt_dim, mid=mid,
        num_classes=num_classes, ml_num=ml_num, num_groups=num_groups,
        in_channel=in_channel, gcn_dim=gcn_dim)

    feature_img = jax.random.normal(k_img, (batch, img_dim), jnp.float32)
    feature_text = jax.random.normal(k_txt, (batch, txt_dim), jnp.float32)

    ussl_forward = make_ussl_forward(beta=beta, jieta=jieta)
    outs = jax.block_until_ready(ussl_forward(params, feature_img, feature_text))

    # minimal sanity checks
    assert outs[0].shape == (batch, mid)
    assert outs[1].shape == (batch, mid)
    assert outs[2].shape == (batch, num_classes)
    assert outs[3].shape == (batch, num_classes)
    assert outs[4].shape == (num_classes, mid)
    assert outs[5].shape == (ml_num, mid)
    assert outs[6].shape == (num_classes, 2)
    assert outs[7].shape == (ml_num, 2)
    assert outs[8].shape == (ml_num, ml_num)
    assert all(bool(jnp.all(jnp.isfinite(o))) for o in outs)
    print("KERNEL_OK")
</pallas_src>

<mosaic_0001>
module attributes {stable_mosaic.version = 11 : i64} {
  func.func @_ussl_kernel(%arg0: memref<8x32xf32, #tpu.memory_space<vmem>>, %arg1: memref<8x16xf32, #tpu.memory_space<vmem>>, %arg2: memref<32x32xf32, #tpu.memory_space<vmem>>, %arg3: memref<1x32xf32, #tpu.memory_space<vmem>>, %arg4: memref<16x32xf32, #tpu.memory_space<vmem>>, %arg5: memref<1x32xf32, #tpu.memory_space<vmem>>, %arg6: memref<8x8xf32, #tpu.memory_space<vmem>>, %arg7: memref<8x8xf32, #tpu.memory_space<vmem>>, %arg8: memref<16x16xf32, #tpu.memory_space<vmem>>, %arg9: memref<16x16xf32, #tpu.memory_space<vmem>>, %arg10: memref<8x16xf32, #tpu.memory_space<vmem>>, %arg11: memref<8x16xf32, #tpu.memory_space<vmem>>, %arg12: memref<8x16xf32, #tpu.memory_space<vmem>>, %arg13: memref<16x8xf32, #tpu.memory_space<vmem>>, %arg14: memref<8x24xf32, #tpu.memory_space<vmem>>, %arg15: memref<16x16xf32, #tpu.memory_space<vmem>>, %arg16: memref<16x16xf32, #tpu.memory_space<vmem>>, %arg17: memref<16x32xf32, #tpu.memory_space<vmem>>, %arg18: memref<1x32xf32, #tpu.memory_space<vmem>>, %arg19: memref<32x8xf32, #tpu.memory_space<vmem>>, %arg20: memref<1x8xf32, #tpu.memory_space<vmem>>, %arg21: memref<8x2xf32, #tpu.memory_space<vmem>>, %arg22: memref<1x2xf32, #tpu.memory_space<vmem>>, %arg23: memref<2x2xf32, #tpu.memory_space<vmem>>, %arg24: memref<1x2xf32, #tpu.memory_space<vmem>>, %arg25: memref<32x8xf32, #tpu.memory_space<vmem>>, %arg26: memref<1x8xf32, #tpu.memory_space<vmem>>, %arg27: memref<8x2xf32, #tpu.memory_space<vmem>>, %arg28: memref<1x2xf32, #tpu.memory_space<vmem>>, %arg29: memref<2x2xf32, #tpu.memory_space<vmem>>, %arg30: memref<1x2xf32, #tpu.memory_space<vmem>>, %arg31: memref<8x32xf32, #tpu.memory_space<vmem>>, %arg32: memref<8x32xf32, #tpu.memory_space<vmem>>, %arg33: memref<8x8xf32, #tpu.memory_space<vmem>>, %arg34: memref<8x8xf32, #tpu.memory_space<vmem>>, %arg35: memref<8x32xf32, #tpu.memory_space<vmem>>, %arg36: memref<16x32xf32, #tpu.memory_space<vmem>>, %arg37: memref<8x2xf32, #tpu.memory_space<vmem>>, %arg38: memref<16x2xf32, #tpu.memory_space<vmem>>, %arg39: memref<16x16xf32, #tpu.memory_space<vmem>>) attributes {dimension_semantics = [], scalar_prefetch = 0 : i64, scratch_operands = 0 : i64, tpu.core_type = #tpu.core_type<tc>} {
    %c0 = arith.constant 0 : index
    %c0_0 = arith.constant 0 : index
    %0 = vector.load %arg0[%c0, %c0_0] : memref<8x32xf32, #tpu.memory_space<vmem>>, vector<8x32xf32>
    %cst = arith.constant dense<0.000000e+00> : vector<32xf32>
    %1 = vector.multi_reduction <add>, %0, %cst [0] : vector<8x32xf32> to vector<32xf32>
    %2 = vector.shape_cast %1 : vector<32xf32> to vector<1x32xf32>
    %cst_1 = arith.constant 8.000000e+00 : f32
    %3 = vector.broadcast %cst_1 : f32 to vector<1x32xf32>
    %4 = arith.divf %2, %3 : vector<1x32xf32>
    %5 = vector.broadcast %4 : vector<1x32xf32> to vector<8x32xf32>
    %6 = arith.subf %0, %5 : vector<8x32xf32>
    %7 = arith.mulf %6, %6 : vector<8x32xf32>
    %cst_2 = arith.constant dense<0.000000e+00> : vector<32xf32>
    %8 = vector.multi_reduction <add>, %7, %cst_2 [0] : vector<8x32xf32> to vector<32xf32>
    %9 = vector.shape_cast %8 : vector<32xf32> to vector<1x32xf32>
    %cst_3 = arith.constant 8.000000e+00 : f32
    %10 = vector.broadcast %cst_3 : f32 to vector<1x32xf32>
    %11 = arith.divf %9, %10 : vector<1x32xf32>
    %12 = vector.broadcast %4 : vector<1x32xf32> to vector<8x32xf32>
    %13 = arith.subf %0, %12 : vector<8x32xf32>
    %cst_4 = arith.constant 9.99999974E-6 : f32
    %14 = vector.broadcast %cst_4 : f32 to vector<1x32xf32>
    %15 = arith.addf %11, %14 : vector<1x32xf32>
    %16 = math.rsqrt %15 : vector<1x32xf32>
    %17 = vector.broadcast %16 : vector<1x32xf32> to vector<8x32xf32>
    %18 = arith.mulf %13, %17 : vector<8x32xf32>
    %c0_5 = arith.constant 0 : index
    %c0_6 = arith.constant 0 : index
    %19 = vector.load %arg2[%c0_5, %c0_6] : memref<32x32xf32, #tpu.memory_space<vmem>>, vector<32x32xf32>
    %cst_7 = arith.constant dense<0.000000e+00> : vector<8x32xf32>
    %20 = tpu.matmul %18, %19, %cst_7 {dimension_numbers = #tpu.dot_dimension_numbers<[1], [0], [0], [1], [0, 0, 1, 1], [], []>} : vector<8x32xf32>, vector<32x32xf32>, vector<8x32xf32> -> vector<8x32xf32>
    %c0_8 = arith.constant 0 : index
    %c0_9 = arith.constant 0 : index
    %21 = vector.load %arg3[%c0_8, %c0_9] : memref<1x32xf32, #tpu.memory_space<vmem>>, vector<1x32xf32>
    %22 = vector.broadcast %21 : vector<1x32xf32> to vector<8x32xf32>
    %23 = arith.addf %20, %22 : vector<8x32xf32>
    %cst_10 = arith.constant 0.000000e+00 : f32
    %24 = vector.broadcast %cst_10 : f32 to vector<8x32xf32>
    %25 = arith.maximumf %23, %24 : vector<8x32xf32>
    %c0_11 = arith.constant 0 : index
    %c0_12 = arith.constant 0 : index
    %26 = vector.load %arg1[%c0_11, %c0_12] : memref<8x16xf32, #tpu.memory_space<vmem>>, vector<8x16xf32>
    %cst_13 = arith.constant dense<0.000000e+00> : vector<16xf32>
    %27 = vector.multi_reduction <add>, %26, %cst_13 [0] : vector<8x16xf32> to vector<16xf32>
    %28 = vector.shape_cast %27 : vector<16xf32> to vector<1x16xf32>
    %cst_14 = arith.constant 8.000000e+00 : f32
    %29 = vector.broadcast %cst_14 : f32 to vector<1x16xf32>
    %30 = arith.divf %28, %29 : vector<1x16xf32>
    %31 = vector.broadcast %30 : vector<1x16xf32> to vector<8x16xf32>
    %32 = arith.subf %26, %31 : vector<8x16xf32>
    %33 = arith.mulf %32, %32 : vector<8x16xf32>
    %cst_15 = arith.constant dense<0.000000e+00> : vector<16xf32>
    %34 = vector.multi_reduction <add>, %33, %cst_15 [0] : vector<8x16xf32> to vector<16xf32>
    %35 = vector.shape_cast %34 : vector<16xf32> to vector<1x16xf32>
    %cst_16 = arith.constant 8.000000e+00 : f32
    %36 = vector.broadcast %cst_16 : f32 to vector<1x16xf32>
    %37 = arith.divf %35, %36 : vector<1x16xf32>
    %38 = vector.broadcast %30 : vector<1x16xf32> to vector<8x16xf32>
    %39 = arith.subf %26, %38 : vector<8x16xf32>
    %cst_17 = arith.constant 9.99999974E-6 : f32
    %40 = vector.broadcast %cst_17 : f32 to vector<1x16xf32>
    %41 = arith.addf %37, %40 : vector<1x16xf32>
    %42 = math.rsqrt %41 : vector<1x16xf32>
    %43 = vector.broadcast %42 : vector<1x16xf32> to vector<8x16xf32>
    %44 = arith.mulf %39, %43 : vector<8x16xf32>
    %c0_18 = arith.constant 0 : index
    %c0_19 = arith.constant 0 : index
    %45 = vector.load %arg4[%c0_18, %c0_19] : memref<16x32xf32, #tpu.memory_space<vmem>>, vector<16x32xf32>
    %cst_20 = arith.constant dense<0.000000e+00> : vector<8x32xf32>
    %46 = tpu.matmul %44, %45, %cst_20 {dimension_numbers = #tpu.dot_dimension_numbers<[1], [0], [0], [1], [0, 0, 1, 1], [], []>} : vector<8x16xf32>, vector<16x32xf32>, vector<8x32xf32> -> vector<8x32xf32>
    %c0_21 = arith.constant 0 : index
    %c0_22 = arith.constant 0 : index
    %47 = vector.load %arg5[%c0_21, %c0_22] : memref<1x32xf32, #tpu.memory_space<vmem>>, vector<1x32xf32>
    %48 = vector.broadcast %47 : vector<1x32xf32> to vector<8x32xf32>
    %49 = arith.addf %46, %48 : vector<8x32xf32>
    %cst_23 = arith.constant 0.000000e+00 : f32
    %50 = vector.broadcast %cst_23 : f32 to vector<8x32xf32>
    %51 = arith.maximumf %49, %50 : vector<8x32xf32>
    %c0_24 = arith.constant 0 : index
    %c0_25 = arith.constant 0 : index
    %52 = vector.load %arg31[%c0_24, %c0_25] : memref<8x32xf32, #tpu.memory_space<vmem>>, vector<8x32xf32>
    tpu.vector_store %arg31[%c0_24, %c0_25], %25 {strides = array<i32>} : memref<8x32xf32, #tpu.memory_space<vmem>>, vector<8x32xf32>,
    %c0_26 = arith.constant 0 : index
    %c0_27 = arith.constant 0 : index
    %53 = vector.load %arg32[%c0_26, %c0_27] : memref<8x32xf32, #tpu.memory_space<vmem>>, vector<8x32xf32>
    tpu.vector_store %arg32[%c0_26, %c0_27], %51 {strides = array<i32>} : memref<8x32xf32, #tpu.memory_space<vmem>>, vector<8x32xf32>,
    %c0_28 = arith.constant 0 : index
    %c0_29 = arith.constant 0 : index
    %54 = vector.load %arg6[%c0_28, %c0_29] : memref<8x8xf32, #tpu.memory_space<vmem>>, vector<8x8xf32>
    %c0_30 = arith.constant 0 : index
    %c0_31 = arith.constant 0 : index
    %55 = vector.load %arg7[%c0_30, %c0_31] : memref<8x8xf32, #tpu.memory_space<vmem>>, vector<8x8xf32>
    %cst_32 = arith.constant 5.000000e-01 : f32
    %56 = vector.broadcast %cst_32 : f32 to vector<8x8xf32>
    %57 = arith.mulf %56, %55 : vector<8x8xf32>
    %58 = arith.addf %54, %57 : vector<8x8xf32>
    %cst_33 = arith.constant 0.000000e+00 : f32
    %59 = vector.broadcast %cst_33 : f32 to vector<8x8xf32>
    %60 = arith.maximumf %58, %59 : vector<8x8xf32>
    %c0_34 = arith.constant 0 : index
    %c0_35 = arith.constant 0 : index
    %61 = vector.load %arg8[%c0_34, %c0_35] : memref<16x16xf32, #tpu.memory_space<vmem>>, vector<16x16xf32>
    %c0_36 = arith.constant 0 : index
    %c0_37 = arith.constant 0 : index
    %62 = vector.load %arg9[%c0_36, %c0_37] : memref<16x16xf32, #tpu.memory_space<vmem>>, vector<16x16xf32>
    %cst_38 = arith.constant 5.000000e-01 : f32
    %63 = vector.broadcast %cst_38 : f32 to vector<16x16xf32>
    %64 = arith.mulf %63, %62 : vector<16x16xf32>
    %65 = arith.addf %61, %64 : vector<16x16xf32>
    %cst_39 = arith.constant 0.000000e+00 : f32
    %66 = vector.broadcast %cst_39 : f32 to vector<16x16xf32>
    %67 = arith.maximumf %65, %66 : vector<16x16xf32>
    %c0_40 = arith.constant 0 : index
    %c0_41 = arith.constant 0 : index
    %68 = vector.load %arg10[%c0_40, %c0_41] : memref<8x16xf32, #tpu.memory_space<vmem>>, vector<8x16xf32>
    %c0_42 = arith.constant 0 : index
    %c0_43 = arith.constant 0 : index
    %69 = vector.load %arg11[%c0_42, %c0_43] : memref<8x16xf32, #tpu.memory_space<vmem>>, vector<8x16xf32>
    %c0_44 = arith.constant 0 : index
    %c0_45 = arith.constant 0 : index
    %70 = vector.load %arg13[%c0_44, %c0_45] : memref<16x8xf32, #tpu.memory_space<vmem>>, vector<16x8xf32>
    %c0_46 = arith.constant 0 : index
    %c0_47 = arith.constant 0 : index
    %71 = vector.load %arg12[%c0_46, %c0_47] : memref<8x16xf32, #tpu.memory_space<vmem>>, vector<8x16xf32>
    %72 = arith.mulf %69, %71 : vector<8x16xf32>
    %cst_48 = arith.constant dense<0.000000e+00> : vector<16x16xf32>
    %73 = tpu.matmul %70, %72, %cst_48 {dimension_numbers = #tpu.dot_dimension_numbers<[1], [0], [0], [1], [0, 0, 1, 1], [], []>} : vector<16x8xf32>, vector<8x16xf32>, vector<16x16xf32> -> vector<16x16xf32>
    %c0_49 = arith.constant 0 : index
    %c0_50 = arith.constant 0 : index
    %74 = vector.load %arg16[%c0_49, %c0_50] : memref<16x16xf32, #tpu.memory_space<vmem>>, vector<16x16xf32>
    %cst_51 = arith.constant dense<0.000000e+00> : vector<8x16xf32>
    %75 = tpu.matmul %69, %74, %cst_51 {dimension_numbers = #tpu.dot_dimension_numbers<[1], [0], [0], [1], [0, 0, 1, 1], [], []>} : vector<8x16xf32>, vector<16x16xf32>, vector<8x16xf32> -> vector<8x16xf32>
    %cst_52 = arith.constant dense<0.000000e+00> : vector<16x16xf32>
    %76 = tpu.matmul %73, %74, %cst_52 {dimension_numbers = #tpu.dot_dimension_numbers<[1], [0], [0], [1], [0, 0, 1, 1], [], []>} : vector<16x16xf32>, vector<16x16xf32>, vector<16x16xf32> -> vector<16x16xf32>
    %cst_53 = arith.constant dense<0.000000e+00> : vector<8xf32>
    %77 = vector.multi_reduction <add>, %60, %cst_53 [1] : vector<8x8xf32> to vector<8xf32>
    %78 = vector.shape_cast %77 : vector<8xf32> to vector<8x1xf32>
    %cst_54 = arith.constant dense<0.000000e+00> : vector<8xf32>
    %79 = vector.multi_reduction <add>, %68, %cst_54 [1] : vector<8x16xf32> to vector<8xf32>
    %80 = vector.shape_cast %79 : vector<8xf32> to vector<8x1xf32>
    %81 = arith.addf %78, %80 : vector<8x1xf32>
    %82 = math.rsqrt %81 : vector<8x1xf32>
    %83 = tpu.transpose %60, [1, 0] : vector<8x8xf32> -> vector<8x8xf32>
    %84 = vector.broadcast %82 : vector<8x1xf32> to vector<8x16xf32>
    %85 = arith.mulf %84, %75 : vector<8x16xf32>
    %cst_55 = arith.constant dense<0.000000e+00> : vector<8x16xf32>
    %86 = tpu.matmul %83, %85, %cst_55 {dimension_numbers = #tpu.dot_dimension_numbers<[1], [0], [0], [1], [0, 0, 1, 1], [], []>} : vector<8x8xf32>, vector<8x16xf32>, vector<8x16xf32> -> vector<8x16xf32>
    %cst_56 = arith.constant dense<0.000000e+00> : vector<16xf32>
    %87 = vector.multi_reduction <add>, %76, %cst_56 [0] : vector<16x16xf32> to vector<16xf32>
    %88 = vector.shape_cast %87 : vector<16xf32> to vector<1x16xf32>
    %cst_57 = arith.constant 0.204124153 : f32
    %89 = vector.broadcast %cst_57 : f32 to vector<1x16xf32>
    %90 = arith.mulf %89, %88 : vector<1x16xf32>
    %91 = vector.broadcast %90 : vector<1x16xf32> to vector<8x16xf32>
    %92 = arith.addf %86, %91 : vector<8x16xf32>
    %93 = vector.broadcast %82 : vector<8x1xf32> to vector<8x16xf32>
    %94 = arith.mulf %93, %92 : vector<8x16xf32>
    %c0_58 = arith.constant 0 : index
    %c0_59 = arith.constant 0 : index
    %95 = vector.load %arg15[%c0_58, %c0_59] : memref<16x16xf32, #tpu.memory_space<vmem>>, vector<16x16xf32>
    %96 = arith.mulf %67, %95 : vector<16x16xf32>
    %97 = tpu.transpose %96, [1, 0] : vector<16x16xf32> -> vector<16x16xf32>
    %98 = tpu.transpose %68, [1, 0] : vector<8x16xf32> -> vector<16x8xf32>
    %c0_60 = arith.constant 0 : index
    %c0_61 = arith.constant 0 : index
    %99 = vector.load %arg14[%c0_60, %c0_61] : memref<8x24xf32, #tpu.memory_space<vmem>>, vector<8x24xf32>
    %cst_62 = arith.constant dense<0.000000e+00> : vector<16xf32>
    %100 = vector.multi_reduction <add>, %96, %cst_62 [1] : vector<16x16xf32> to vector<16xf32>
    %101 = vector.shape_cast %100 : vector<16xf32> to vector<16x1xf32>
    %cst_63 = arith.constant dense<0.000000e+00> : vector<16xf32>
    %102 = vector.multi_reduction <add>, %98, %cst_63 [1] : vector<16x8xf32> to vector<16xf32>
    %103 = vector.shape_cast %102 : vector<16xf32> to vector<16x1xf32>
    %104 = arith.addf %101, %103 : vector<16x1xf32>
    %105 = math.rsqrt %104 : vector<16x1xf32>
    %cst_64 = arith.constant dense<0.000000e+00> : vector<8xf32>
    %106 = vector.multi_reduction <add>, %99, %cst_64 [1] : vector<8x24xf32> to vector<8xf32>
    %107 = vector.shape_cast %106 : vector<8xf32> to vector<8x1xf32>
    %108 = math.rsqrt %107 : vector<8x1xf32>
    %109 = vector.extract_strided_slice %99 {offsets = [0, 0], sizes = [8, 16], strides = [1, 1]} : vector<8x24xf32> to vector<8x16xf32>
    %110 = tpu.transpose %109, [1, 0] : vector<8x16xf32> -> vector<16x8xf32>
    %111 = vector.broadcast %105 : vector<16x1xf32> to vector<16x16xf32>
    %112 = arith.mulf %111, %76 : vector<16x16xf32>
    %cst_65 = arith.constant dense<0.000000e+00> : vector<16x16xf32>
    %113 = tpu.matmul %97, %112, %cst_65 {dimension_numbers = #tpu.dot_dimension_numbers<[1], [0], [0], [1], [0, 0, 1, 1], [], []>} : vector<16x16xf32>, vector<16x16xf32>, vector<16x16xf32> -> vector<16x16xf32>
    %114 = vector.broadcast %108 : vector<8x1xf32> to vector<8x16xf32>
    %115 = arith.mulf %114, %75 : vector<8x16xf32>
    %cst_66 = arith.constant dense<0.000000e+00> : vector<16x16xf32>
    %116 = tpu.matmul %110, %115, %cst_66 {dimension_numbers = #tpu.dot_dimension_numbers<[1], [0], [0], [1], [0, 0, 1, 1], [], []>} : vector<16x8xf32>, vector<8x16xf32>, vector<16x16xf32> -> vector<16x16xf32>
    %117 = arith.addf %113, %116 : vector<16x16xf32>
    %118 = vector.broadcast %105 : vector<16x1xf32> to vector<16x16xf32>
    %119 = arith.mulf %118, %117 : vector<16x16xf32>
    %120 = vector.broadcast %105 : vector<16x1xf32> to vector<16x16xf32>
    %121 = arith.mulf %120, %96 : vector<16x16xf32>
    %122 = tpu.transpose %121, [1, 0] : vector<16x16xf32> -> vector<16x16xf32>
    %123 = vector.broadcast %105 : vector<16x1xf32> to vector<16x16xf32>
    %124 = arith.mulf %123, %122 : vector<16x16xf32>
    %c0_67 = arith.constant 0 : index
    %c0_68 = arith.constant 0 : index
    %125 = vector.load %arg39[%c0_67, %c0_68] : memref<16x16xf32, #tpu.memory_space<vmem>>, vector<16x16xf32>
    tpu.vector_store %arg39[%c0_67, %c0_68], %124 {strides = array<i32>} : memref<16x16xf32, #tpu.memory_space<vmem>>, vector<16x16xf32>,
    %c0_69 = arith.constant 0 : index
    %c0_70 = arith.constant 0 : index
    %126 = vector.load %arg17[%c0_69, %c0_70] : memref<16x32xf32, #tpu.memory_space<vmem>>, vector<16x32xf32>
    %c0_71 = arith.constant 0 : index
    %c0_72 = arith.constant 0 : index
    %127 = vector.load %arg18[%c0_71, %c0_72] : memref<1x32xf32, #tpu.memory_space<vmem>>, vector<1x32xf32>
    %cst_73 = arith.constant dense<0.000000e+00> : vector<8x32xf32>
    %128 = tpu.matmul %94, %126, %cst_73 {dimension_numbers = #tpu.dot_dimension_numbers<[1], [0], [0], [1], [0, 0, 1, 1], [], []>} : vector<8x16xf32>, vector<16x32xf32>, vector<8x32xf32> -> vector<8x32xf32>
    %129 = vector.broadcast %127 : vector<1x32xf32> to vector<8x32xf32>
    %130 = arith.addf %128, %129 : vector<8x32xf32>
    %cst_74 = arith.constant dense<0.000000e+00> : vector<16x32xf32>
    %131 = tpu.matmul %119, %126, %cst_74 {dimension_numbers = #tpu.dot_dimension_numbers<[1], [0], [0], [1], [0, 0, 1, 1], [], []>} : vector<16x16xf32>, vector<16x32xf32>, vector<16x32xf32> -> vector<16x32xf32>
    %132 = vector.broadcast %127 : vector<1x32xf32> to vector<16x32xf32>
    %133 = arith.addf %131, %132 : vector<16x32xf32>
    %c0_75 = arith.constant 0 : index
    %c0_76 = arith.constant 0 : index
    %134 = vector.load %arg35[%c0_75, %c0_76] : memref<8x32xf32, #tpu.memory_space<vmem>>, vector<8x32xf32>
    tpu.vector_store %arg35[%c0_75, %c0_76], %130 {strides = array<i32>} : memref<8x32xf32, #tpu.memory_space<vmem>>, vector<8x32xf32>,
    %c0_77 = arith.constant 0 : index
    %c0_78 = arith.constant 0 : index
    %135 = vector.load %arg36[%c0_77, %c0_78] : memref<16x32xf32, #tpu.memory_space<vmem>>, vector<16x32xf32>
    tpu.vector_store %arg36[%c0_77, %c0_78], %133 {strides = array<i32>} : memref<16x32xf32, #tpu.memory_space<vmem>>, vector<16x32xf32>,
    %136 = tpu.concatenate %25, %51 in 0 : vector<8x32xf32>, vector<8x32xf32> -> vector<16x32xf32>
    %137 = arith.mulf %136, %136 : vector<16x32xf32>
    %cst_79 = arith.constant dense<0.000000e+00> : vector<16xf32>
    %138 = vector.multi_reduction <add>, %137, %cst_79 [1] : vector<16x32xf32> to vector<16xf32>
    %139 = vector.shape_cast %138 : vector<16xf32> to vector<16x1xf32>
    %140 = math.sqrt %139 : vector<16x1xf32>
    %141 = tpu.transpose %130, [1, 0] : vector<8x32xf32> -> vector<32x8xf32>
    %142 = arith.mulf %141, %141 : vector<32x8xf32>
    %cst_80 = arith.constant dense<0.000000e+00> : vector<8xf32>
    %143 = vector.multi_reduction <add>, %142, %cst_80 [0] : vector<32x8xf32> to vector<8xf32>
    %144 = vector.shape_cast %143 : vector<8xf32> to vector<1x8xf32>
    %145 = math.sqrt %144 : vector<1x8xf32>
    %cst_81 = arith.constant dense<0.000000e+00> : vector<16x8xf32>
    %146 = tpu.matmul %136, %141, %cst_81 {dimension_numbers = #tpu.dot_dimension_numbers<[1], [0], [0], [1], [0, 0, 1, 1], [], []>} : vector<16x32xf32>, vector<32x8xf32>, vector<16x8xf32> -> vector<16x8xf32>
    %147 = vector.broadcast %140 : vector<16x1xf32> to vector<16x8xf32>
    %148 = vector.broadcast %145 : vector<1x8xf32> to vector<16x8xf32>
    %149 = arith.mulf %147, %148 : vector<16x8xf32>
    %cst_82 = arith.constant 9.99999997E-7 : f32
    %150 = vector.broadcast %cst_82 : f32 to vector<16x8xf32>
    %151 = arith.addf %149, %150 : vector<16x8xf32>
    %152 = tpu.reciprocal %151 {approx = true} : vector<16x8xf32> -> vector<16x8xf32>
    %153 = arith.mulf %146, %152 : vector<16x8xf32>
    %154 = vector.extract_strided_slice %153 {offsets = [0, 0], sizes = [8, 8], strides = [1, 1]} : vector<16x8xf32> to vector<8x8xf32>
    %c0_83 = arith.constant 0 : index
    %c0_84 = arith.constant 0 : index
    %155 = vector.load %arg33[%c0_83, %c0_84] : memref<8x8xf32, #tpu.memory_space<vmem>>, vector<8x8xf32>
    tpu.vector_store %arg33[%c0_83, %c0_84], %154 {strides = array<i32>} : memref<8x8xf32, #tpu.memory_space<vmem>>, vector<8x8xf32>,
    %156 = vector.extract_strided_slice %153 {offsets = [8, 0], sizes = [8, 8], strides = [1, 1]} : vector<16x8xf32> to vector<8x8xf32>
    %c0_85 = arith.constant 0 : index
    %c0_86 = arith.constant 0 : index
    %157 = vector.load %arg34[%c0_85, %c0_86] : memref<8x8xf32, #tpu.memory_space<vmem>>, vector<8x8xf32>
    tpu.vector_store %arg34[%c0_85, %c0_86], %156 {strides = array<i32>} : memref<8x8xf32, #tpu.memory_space<vmem>>, vector<8x8xf32>,
    %c0_87 = arith.constant 0 : index
    %c0_88 = arith.constant 0 : index
    %158 = vector.load %arg19[%c0_87, %c0_88] : memref<32x8xf32, #tpu.memory_space<vmem>>, vector<32x8xf32>
    %c0_89 = arith.constant 0 : index
    %c0_90 = arith.constant 0 : index
    %159 = vector.load %arg20[%c0_89, %c0_90] : memref<1x8xf32, #tpu.memory_space<vmem>>, vector<1x8xf32>
    %c0_91 = arith.constant 0 : index
    %c0_92 = arith.constant 0 : index
    %160 = vector.load %arg21[%c0_91, %c0_92] : memref<8x2xf32, #tpu.memory_space<vmem>>, vector<8x2xf32>
    %c0_93 = arith.constant 0 : index
    %c0_94 = arith.constant 0 : index
    %161 = vector.load %arg22[%c0_93, %c0_94] : memref<1x2xf32, #tpu.memory_space<vmem>>, vector<1x2xf32>
    %c0_95 = arith.constant 0 : index
    %c0_96 = arith.constant 0 : index
    %162 = vector.load %arg23[%c0_95, %c0_96] : memref<2x2xf32, #tpu.memory_space<vmem>>, vector<2x2xf32>
    %c0_97 = arith.constant 0 : index
    %c0_98 = arith.constant 0 : index
    %163 = vector.load %arg24[%c0_97, %c0_98] : memref<1x2xf32, #tpu.memory_space<vmem>>, vector<1x2xf32>
    %cst_99 = arith.constant dense<0.000000e+00> : vector<32xf32>
    %164 = vector.multi_reduction <add>, %130, %cst_99 [0] : vector<8x32xf32> to vector<32xf32>
    %165 = vector.shape_cast %164 : vector<32xf32> to vector<1x32xf32>
    %cst_100 = arith.constant 8.000000e+00 : f32
    %166 = vector.broadcast %cst_100 : f32 to vector<1x32xf32>
    %167 = arith.divf %165, %166 : vector<1x32xf32>
    %168 = vector.broadcast %167 : vector<1x32xf32> to vector<8x32xf32>
    %169 = arith.subf %130, %168 : vector<8x32xf32>
    %170 = arith.mulf %169, %169 : vector<8x32xf32>
    %cst_101 = arith.constant dense<0.000000e+00> : vector<32xf32>
    %171 = vector.multi_reduction <add>, %170, %cst_101 [0] : vector<8x32xf32> to vector<32xf32>
    %172 = vector.shape_cast %171 : vector<32xf32> to vector<1x32xf32>
    %cst_102 = arith.constant 8.000000e+00 : f32
    %173 = vector.broadcast %cst_102 : f32 to vector<1x32xf32>
    %174 = arith.divf %172, %173 : vector<1x32xf32>
    %175 = vector.broadcast %167 : vector<1x32xf32> to vector<8x32xf32>
    %176 = arith.subf %130, %175 : vector<8x32xf32>
    %cst_103 = arith.constant 9.99999974E-6 : f32
    %177 = vector.broadcast %cst_103 : f32 to vector<1x32xf32>
    %178 = arith.addf %174, %177 : vector<1x32xf32>
    %179 = math.rsqrt %178 : vector<1x32xf32>
    %180 = vector.broadcast %179 : vector<1x32xf32> to vector<8x32xf32>
    %181 = arith.mulf %176, %180 : vector<8x32xf32>
    %cst_104 = arith.constant dense<0.000000e+00> : vector<8x8xf32>
    %182 = tpu.matmul %181, %158, %cst_104 {dimension_numbers = #tpu.dot_dimension_numbers<[1], [0], [0], [1], [0, 0, 1, 1], [], []>} : vector<8x32xf32>, vector<32x8xf32>, vector<8x8xf32> -> vector<8x8xf32>
    %183 = vector.broadcast %159 : vector<1x8xf32> to vector<8x8xf32>
    %184 = arith.addf %182, %183 : vector<8x8xf32>
    %cst_105 = arith.constant 0.000000e+00 : f32
    %185 = vector.broadcast %cst_105 : f32 to vector<8x8xf32>
    %186 = arith.maximumf %184, %185 : vector<8x8xf32>
    %cst_106 = arith.constant dense<0.000000e+00> : vector<8x2xf32>
    %187 = tpu.matmul %186, %160, %cst_106 {dimension_numbers = #tpu.dot_dimension_numbers<[1], [0], [0], [1], [0, 0, 1, 1], [], []>} : vector<8x8xf32>, vector<8x2xf32>, vector<8x2xf32> -> vector<8x2xf32>
    %188 = vector.broadcast %161 : vector<1x2xf32> to vector<8x2xf32>
    %189 = arith.addf %187, %188 : vector<8x2xf32>
    %cst_107 = arith.constant 0.000000e+00 : f32
    %190 = vector.broadcast %cst_107 : f32 to vector<8x2xf32>
    %191 = arith.maximumf %189, %190 : vector<8x2xf32>
    %cst_108 = arith.constant dense<0.000000e+00> : vector<8x2xf32>
    %192 = tpu.matmul %191, %162, %cst_108 {dimension_numbers = #tpu.dot_dimension_numbers<[1], [0], [0], [1], [0, 0, 1, 1], [], []>} : vector<8x2xf32>, vector<2x2xf32>, vector<8x2xf32> -> vector<8x2xf32>
    %193 = vector.broadcast %163 : vector<1x2xf32> to vector<8x2xf32>
    %194 = arith.addf %192, %193 : vector<8x2xf32>
    %cst_109 = arith.constant dense<0xFF800000> : vector<8xf32>
    %195 = vector.multi_reduction <maximumf>, %194, %cst_109 [1] : vector<8x2xf32> to vector<8xf32>
    %196 = vector.shape_cast %195 : vector<8xf32> to vector<8x1xf32>
    %197 = vector.broadcast %196 : vector<8x1xf32> to vector<8x2xf32>
    %198 = arith.subf %194, %197 : vector<8x2xf32>
    %199 = math.exp %198 : vector<8x2xf32>
    %cst_110 = arith.constant dense<0.000000e+00> : vector<8xf32>
    %200 = vector.multi_reduction <add>, %199, %cst_110 [1] : vector<8x2xf32> to vector<8xf32>
    %201 = vector.shape_cast %200 : vector<8xf32> to vector<8x1xf32>
    %202 = vector.broadcast %201 : vector<8x1xf32> to vector<8x2xf32>
    %203 = arith.divf %199, %202 : vector<8x2xf32>
    %c0_111 = arith.constant 0 : index
    %c0_112 = arith.constant 0 : index
    %204 = vector.load %arg37[%c0_111, %c0_112] : memref<8x2xf32, #tpu.memory_space<vmem>>, vector<8x2xf32>
    tpu.vector_store %arg37[%c0_111, %c0_112], %203 {strides = array<i32>} : memref<8x2xf32, #tpu.memory_space<vmem>>, vector<8x2xf32>,
    %c0_113 = arith.constant 0 : index
    %c0_114 = arith.constant 0 : index
    %205 = vector.load %arg25[%c0_113, %c0_114] : memref<32x8xf32, #tpu.memory_space<vmem>>, vector<32x8xf32>
    %c0_115 = arith.constant 0 : index
    %c0_116 = arith.constant 0 : index
    %206 = vector.load %arg26[%c0_115, %c0_116] : memref<1x8xf32, #tpu.memory_space<vmem>>, vector<1x8xf32>
    %c0_117 = arith.constant 0 : index
    %c0_118 = arith.constant 0 : index
    %207 = vector.load %arg27[%c0_117, %c0_118] : memref<8x2xf32, #tpu.memory_space<vmem>>, vector<8x2xf32>
    %c0_119 = arith.constant 0 : index
    %c0_120 = arith.constant 0 : index
    %208 = vector.load %arg28[%c0_119, %c0_120] : memref<1x2xf32, #tpu.memory_space<vmem>>, vector<1x2xf32>
    %c0_121 = arith.constant 0 : index
    %c0_122 = arith.constant 0 : index
    %209 = vector.load %arg29[%c0_121, %c0_122] : memref<2x2xf32, #tpu.memory_space<vmem>>, vector<2x2xf32>
    %c0_123 = arith.constant 0 : index
    %c0_124 = arith.constant 0 : index
    %210 = vector.load %arg30[%c0_123, %c0_124] : memref<1x2xf32, #tpu.memory_space<vmem>>, vector<1x2xf32>
    %cst_125 = arith.constant dense<0.000000e+00> : vector<32xf32>
    %211 = vector.multi_reduction <add>, %133, %cst_125 [0] : vector<16x32xf32> to vector<32xf32>
    %212 = vector.shape_cast %211 : vector<32xf32> to vector<1x32xf32>
    %cst_126 = arith.constant 1.600000e+01 : f32
    %213 = vector.broadcast %cst_126 : f32 to vector<1x32xf32>
    %214 = arith.divf %212, %213 : vector<1x32xf32>
    %215 = vector.broadcast %214 : vector<1x32xf32> to vector<16x32xf32>
    %216 = arith.subf %133, %215 : vector<16x32xf32>
    %217 = arith.mulf %216, %216 : vector<16x32xf32>
    %cst_127 = arith.constant dense<0.000000e+00> : vector<32xf32>
    %218 = vector.multi_reduction <add>, %217, %cst_127 [0] : vector<16x32xf32> to vector<32xf32>
    %219 = vector.shape_cast %218 : vector<32xf32> to vector<1x32xf32>
    %cst_128 = arith.constant 1.600000e+01 : f32
    %220 = vector.broadcast %cst_128 : f32 to vector<1x32xf32>
    %221 = arith.divf %219, %220 : vector<1x32xf32>
    %222 = vector.broadcast %214 : vector<1x32xf32> to vector<16x32xf32>
    %223 = arith.subf %133, %222 : vector<16x32xf32>
    %cst_129 = arith.constant 9.99999974E-6 : f32
    %224 = vector.broadcast %cst_129 : f32 to vector<1x32xf32>
    %225 = arith.addf %221, %224 : vector<1x32xf32>
    %226 = math.rsqrt %225 : vector<1x32xf32>
    %227 = vector.broadcast %226 : vector<1x32xf32> to vector<16x32xf32>
    %228 = arith.mulf %223, %227 : vector<16x32xf32>
    %cst_130 = arith.constant dense<0.000000e+00> : vector<16x8xf32>
    %229 = tpu.matmul %228, %205, %cst_130 {dimension_numbers = #tpu.dot_dimension_numbers<[1], [0], [0], [1], [0, 0, 1, 1], [], []>} : vector<16x32xf32>, vector<32x8xf32>, vector<16x8xf32> -> vector<16x8xf32>
    %230 = vector.broadcast %206 : vector<1x8xf32> to vector<16x8xf32>
    %231 = arith.addf %229, %230 : vector<16x8xf32>
    %cst_131 = arith.constant 0.000000e+00 : f32
    %232 = vector.broadcast %cst_131 : f32 to vector<16x8xf32>
    %233 = arith.maximumf %231, %232 : vector<16x8xf32>
    %cst_132 = arith.constant dense<0.000000e+00> : vector<16x2xf32>
    %234 = tpu.matmul %233, %207, %cst_132 {dimension_numbers = #tpu.dot_dimension_numbers<[1], [0], [0], [1], [0, 0, 1, 1], [], []>} : vector<16x8xf32>, vector<8x2xf32>, vector<16x2xf32> -> vector<16x2xf32>
    %235 = vector.broadcast %208 : vector<1x2xf32> to vector<16x2xf32>
    %236 = arith.addf %234, %235 : vector<16x2xf32>
    %cst_133 = arith.constant 0.000000e+00 : f32
    %237 = vector.broadcast %cst_133 : f32 to vector<16x2xf32>
    %238 = arith.maximumf %236, %237 : vector<16x2xf32>
    %cst_134 = arith.constant dense<0.000000e+00> : vector<16x2xf32>
    %239 = tpu.matmul %238, %209, %cst_134 {dimension_numbers = #tpu.dot_dimension_numbers<[1], [0], [0], [1], [0, 0, 1, 1], [], []>} : vector<16x2xf32>, vector<2x2xf32>, vector<16x2xf32> -> vector<16x2xf32>
    %240 = vector.broadcast %210 : vector<1x2xf32> to vector<16x2xf32>
    %241 = arith.addf %239, %240 : vector<16x2xf32>
    %cst_135 = arith.constant dense<0xFF800000> : vector<16xf32>
    %242 = vector.multi_reduction <maximumf>, %241, %cst_135 [1] : vector<16x2xf32> to vector<16xf32>
    %243 = vector.shape_cast %242 : vector<16xf32> to vector<16x1xf32>
    %244 = vector.broadcast %243 : vector<16x1xf32> to vector<16x2xf32>
    %245 = arith.subf %241, %244 : vector<16x2xf32>
    %246 = math.exp %245 : vector<16x2xf32>
    %cst_136 = arith.constant dense<0.000000e+00> : vector<16xf32>
    %247 = vector.multi_reduction <add>, %246, %cst_136 [1] : vector<16x2xf32> to vector<16xf32>
    %248 = vector.shape_cast %247 : vector<16xf32> to vector<16x1xf32>
    %249 = vector.broadcast %248 : vector<16x1xf32> to vector<16x2xf32>
    %250 = arith.divf %246, %249 : vector<16x2xf32>
    %c0_137 = arith.constant 0 : index
    %c0_138 = arith.constant 0 : index
    %251 = vector.load %arg38[%c0_137, %c0_138] : memref<16x2xf32, #tpu.memory_space<vmem>>, vector<16x2xf32>
    tpu.vector_store %arg38[%c0_137, %c0_138], %250 {strides = array<i32>} : memref<16x2xf32, #tpu.memory_space<vmem>>, vector<16x2xf32>,
    return
  }
}

</mosaic_0001>

<llo_original>
// kernel: tpu_custom_call.1
$region0: #{tpu_custom_call.1}
  #allocation0 [shape = 'u32[]', space=smem, size = 0x4, offset = 0x4, fixed_abs, tag = 'smem constant byte address 0x4 - core index']
  #allocation1 [shape = 'u32[144,128]{1,0:T(1,128)}', space=vmem, size = 0x12000, scoped, tag = 'internal scratch']
  %s0 = inlined_call_operand.smem [shape: u32[40], index: -1, kind: input, shape index: {}]
  %s1 = sld [smem:[%s0]]
  %s2 = scalar_lea.smem %s0, 1
  %s3 = sld [smem:[%s2]]
  %s4 = scalar_lea.smem %s0, 2
  %s5 = sld [smem:[%s4]]
  %s6 = scalar_lea.smem %s0, 3
  %s7 = sld [smem:[%s6]]
  %s8 = scalar_lea.smem %s0, 4
  %s9 = sld [smem:[%s8]]
  %s10 = scalar_lea.smem %s0, 5
  %s11 = sld [smem:[%s10]]
  %s12 = scalar_lea.smem %s0, 6
  %s13 = sld [smem:[%s12]]
  %s14 = scalar_lea.smem %s0, 7
  %s15 = sld [smem:[%s14]]
  %s16 = scalar_lea.smem %s0, 8
  %s17 = sld [smem:[%s16]]
  %s18 = scalar_lea.smem %s0, 9
  %s19 = sld [smem:[%s18]]
  %s20 = scalar_lea.smem %s0, 10
  %s21 = sld [smem:[%s20]]
  %s22 = scalar_lea.smem %s0, 11
  %s23 = sld [smem:[%s22]]
  %s24 = scalar_lea.smem %s0, 12
  %s25 = sld [smem:[%s24]]
  %s26 = scalar_lea.smem %s0, 13
  %s27 = sld [smem:[%s26]]
  %s28 = scalar_lea.smem %s0, 14
  %s29 = sld [smem:[%s28]]
  %s30 = scalar_lea.smem %s0, 15
  %s31 = sld [smem:[%s30]]
  %s32 = scalar_lea.smem %s0, 16
  %s33 = sld [smem:[%s32]]
  %s34 = scalar_lea.smem %s0, 17
  %s35 = sld [smem:[%s34]]
  %s36 = scalar_lea.smem %s0, 18
  %s37 = sld [smem:[%s36]]
  %s38 = scalar_lea.smem %s0, 19
  %s39 = sld [smem:[%s38]]
  %s40 = scalar_lea.smem %s0, 20
  %s41 = sld [smem:[%s40]]
  %s42 = scalar_lea.smem %s0, 21
  %s43 = sld [smem:[%s42]]
  %s44 = scalar_lea.smem %s0, 22
  %s45 = sld [smem:[%s44]]
  %s46 = scalar_lea.smem %s0, 23
  %s47 = sld [smem:[%s46]]
  %s48 = scalar_lea.smem %s0, 24
  %s49 = sld [smem:[%s48]]
  %s50 = scalar_lea.smem %s0, 25
  %s51 = sld [smem:[%s50]]
  %s52 = scalar_lea.smem %s0, 26
  %s53 = sld [smem:[%s52]]
  %s54 = scalar_lea.smem %s0, 27
  %s55 = sld [smem:[%s54]]
  %s56 = scalar_lea.smem %s0, 28
  %s57 = sld [smem:[%s56]]
  %s58 = scalar_lea.smem %s0, 29
  %s59 = sld [smem:[%s58]]
  %s60 = scalar_lea.smem %s0, 30
  %s61 = sld [smem:[%s60]]
  %s62 = scalar_lea.smem %s0, 31
  %s63 = sld [smem:[%s62]]
  %s64 = scalar_lea.smem %s0, 32
  %s65 = sld [smem:[%s64]]
  %s66 = scalar_lea.smem %s0, 33
  %s67 = sld [smem:[%s66]]
  %s68 = scalar_lea.smem %s0, 34
  %s69 = sld [smem:[%s68]]
  %s70 = scalar_lea.smem %s0, 35
  %s71 = sld [smem:[%s70]]
  %s72 = scalar_lea.smem %s0, 36
  %s73 = sld [smem:[%s72]]
  %s74 = scalar_lea.smem %s0, 37
  %s75 = sld [smem:[%s74]]
  %s76 = scalar_lea.smem %s0, 38
  %s77 = sld [smem:[%s76]]
  %s78 = scalar_lea.smem %s0, 39
  %s79 = sld [smem:[%s78]]
  %80 = xla_tuple %s63, %s65, %s67, %s69, %s71, %s73, %s75, %s77, %s79
  %s81 = sld [smem:[#allocation0]]
  $region238: #{tpu_custom_call.1} parent=0
    _
  %s83 = ssub.s32 1, %s81
  %s84 = scalar_select 0, %s83, %s81
  $region1: #{tpu_custom_call.1} parent=0
    #allocation2 [shape = 'u8[4096]{0}', space=vmem, size = 0x1000, scoped, tag = 'input window, operand 0, single buffered']
    #allocation3 [shape = 's32[1]{0}', space=sflag, size = 0x4, scoped, tag = 'scoped memory for tpu_custom_call.1']
    #allocation4 [shape = 's32[1]{0}', space=sflag, size = 0x4, scoped, tag = 'scoped memory for tpu_custom_call.1']
    #allocation5 [shape = 'u8[4096]{0}', space=vmem, size = 0x1000, scoped, tag = 'input window, operand 1, single buffered']
    #allocation6 [shape = 's32[1]{0}', space=sflag, size = 0x4, scoped, tag = 'scoped memory for tpu_custom_call.1']
    #allocation7 [shape = 'u8[512]{0}', space=vmem, size = 0x400, scoped, tag = 'input window, operand 3, single buffered']
    #allocation8 [shape = 'u8[512]{0}', space=vmem, size = 0x400, scoped, tag = 'input window, operand 5, single buffered']
    #allocation9 [shape = 's32[1]{0}', space=sflag, size = 0x4, scoped, tag = 'scoped memory for tpu_custom_call.1']
    #allocation10 [shape = 'u8[4096]{0}', space=vmem, size = 0x1000, scoped, tag = 'input window, operand 6, single buffered']
    #allocation11 [shape = 'u8[4096]{0}', space=vmem, size = 0x1000, scoped, tag = 'input window, operand 7, single buffered']
    #allocation12 [shape = 's32[1]{0}', space=sflag, size = 0x4, scoped, tag = 'scoped memory for tpu_custom_call.1']
    #allocation13 [shape = 'u8[4096]{0}', space=vmem, size = 0x1000, scoped, tag = 'input window, operand 10, single buffered']
    #allocation14 [shape = 'u8[4096]{0}', space=vmem, size = 0x1000, scoped, tag = 'input window, operand 11, single buffered']
    #allocation15 [shape = 's32[1]{0}', space=sflag, size = 0x4, scoped, tag = 'scoped memory for tpu_custom_call.1']
    #allocation16 [shape = 'u8[4096]{0}', space=vmem, size = 0x1000, scoped, tag = 'input window, operand 12, single buffered']
    #allocation17 [shape = 'u8[4096]{0}', space=vmem, size = 0x1000, scoped, tag = 'input window, operand 14, single buffered']
    #allocation18 [shape = 's32[1]{0}', space=sflag, size = 0x4, scoped, tag = 'scoped memory for tpu_custom_call.1']
    #allocation19 [shape = 'u8[4096]{0}', space=vmem, size = 0x1000, scoped, tag = 'output window, operand 0, single buffered']
    #allocation20 [shape = 'u8[4096]{0}', space=vmem, size = 0x1000, scoped, tag = 'output window, operand 1, single buffered']
    #allocation21 [shape = 's32[1]{0}', space=sflag, size = 0x4, scoped, tag = 'scoped memory for tpu_custom_call.1']
    #allocation22 [shape = 'u8[4096]{0}', space=vmem, size = 0x1000, scoped, tag = 'output window, operand 2, single buffered']
    #allocation23 [shape = 'u8[4096]{0}', space=vmem, size = 0x1000, scoped, tag = 'output window, operand 3, single buffered']
    #allocation24 [shape = 's32[1]{0}', space=sflag, size = 0x4, scoped, tag = 'scoped memory for tpu_custom_call.1']
    #allocation25 [shape = 'u8[4096]{0}', space=vmem, size = 0x1000, scoped, tag = 'output window, operand 4, single buffered']
    #allocation26 [shape = 'u8[8192]{0}', space=vmem, size = 0x2000, scoped, tag = 'output window, operand 5, single buffered']
    #allocation27 [shape = 's32[1]{0}', space=sflag, size = 0x4, scoped, tag = 'scoped memory for tpu_custom_call.1']
    #allocation28 [shape = 'u8[8192]{0}', space=vmem, size = 0x2000, scoped, tag = 'output window, operand 8, single buffered']
    %85 = vsyncpa [#allocation3], 0
    %86 = vsyncpa [#allocation6], 0
    %87 = vsyncpa [#allocation9], 0
    %88 = vsyncpa [#allocation12], 0
    %89 = vsyncpa [#allocation15], 0
    %90 = vsyncpa [#allocation18], 0
    %91 = vsyncpa [#allocation4], 0
    %92 = vsyncpa [#allocation21], 0
    %93 = vsyncpa [#allocation24], 0
    %94 = vsyncpa [#allocation27], 0
    // Predicated region
    $region2: #{tpu_custom_call.1} parent=1 // pred_check
      _
    $region3: #{tpu_custom_call.1} parent=1 // pred_check_branch
      %96 = sbr.rel (0) target = $region5
    $region4: #{tpu_custom_call.1} parent=1 // pred_region
      %s98 = ssub.s32 128, 128
      %99 = vsyncadd [#allocation3], %s98
      %s101 = sshll.u32 [#allocation2], 4
      %s102 = int_to_ptr.vmem [resolvable:$true] %s101
      %104 = dma.hbm_to_vmem [thread:$0]  %s1, 128, %s102, [#allocation3]
    $region5: #{tpu_custom_call.1} parent=1 // pred_fallthru
      _
    // Predicated region
    $region6: #{tpu_custom_call.1} parent=1 // pred_check
      _
    $region7: #{tpu_custom_call.1} parent=1 // pred_check_branch
      %106 = sbr.rel (0) target = $region9
    $region8: #{tpu_custom_call.1} parent=1 // pred_region
      %s108 = ssub.s32 128, 128
      %109 = vsyncadd [#allocation6], %s108
      %s111 = sshll.u32 [#allocation5], 4
      %s112 = int_to_ptr.vmem [resolvable:$true] %s111
      %114 = dma.hbm_to_vmem [thread:$0]  %s3, 128, %s112, [#allocation6]
    $region9: #{tpu_custom_call.1} parent=1 // pred_fallthru
      _
    // Predicated region
    $region10: #{tpu_custom_call.1} parent=1 // pred_check
      _
    $region11: #{tpu_custom_call.1} parent=1 // pred_check_branch
      %116 = sbr.rel (0) target = $region13
    $region12: #{tpu_custom_call.1} parent=1 // pred_region
      _
    $region13: #{tpu_custom_call.1} parent=1 // pred_fallthru
      _
    // Predicated region
    $region14: #{tpu_custom_call.1} parent=1 // pred_check
      _
    $region15: #{tpu_custom_call.1} parent=1 // pred_check_branch
      %118 = sbr.rel (0) target = $region17
    $region16: #{tpu_custom_call.1} parent=1 // pred_region
      %s120 = ssub.s32 16, 16
      %121 = vsyncadd [#allocation6], %s120
      %s123 = sshll.u32 [#allocation7], 4
      %s124 = int_to_ptr.vmem [resolvable:$true] %s123
      %126 = dma.hbm_to_vmem [thread:$0]  %s7, 16, %s124, [#allocation6]
    $region17: #{tpu_custom_call.1} parent=1 // pred_fallthru
      _
    // Predicated region
    $region18: #{tpu_custom_call.1} parent=1 // pred_check
      _
    $region19: #{tpu_custom_call.1} parent=1 // pred_check_branch
      %128 = sbr.rel (0) target = $region21
    $region20: #{tpu_custom_call.1} parent=1 // pred_region
      _
    $region21: #{tpu_custom_call.1} parent=1 // pred_fallthru
      _
    // Predicated region
    $region22: #{tpu_custom_call.1} parent=1 // pred_check
      _
    $region23: #{tpu_custom_call.1} parent=1 // pred_check_branch
      %130 = sbr.rel (0) target = $region25
    $region24: #{tpu_custom_call.1} parent=1 // pred_region
      %s132 = ssub.s32 16, 16
      %133 = vsyncadd [#allocation9], %s132
      %s135 = sshll.u32 [#allocation8], 4
      %s136 = int_to_ptr.vmem [resolvable:$true] %s135
      %138 = dma.hbm_to_vmem [thread:$0]  %s11, 16, %s136, [#allocation9]
    $region25: #{tpu_custom_call.1} parent=1 // pred_fallthru
      _
    // Predicated region
    $region26: #{tpu_custom_call.1} parent=1 // pred_check
      _
    $region27: #{tpu_custom_call.1} parent=1 // pred_check_branch
      %140 = sbr.rel (0) target = $region29
    $region28: #{tpu_custom_call.1} parent=1 // pred_region
      %s142 = ssub.s32 128, 128
      %143 = vsyncadd [#allocation9], %s142
      %s145 = sshll.u32 [#allocation10], 4
      %s146 = int_to_ptr.vmem [resolvable:$true] %s145
      %148 = dma.hbm_to_vmem [thread:$0]  %s13, 128, %s146, [#allocation9]
    $region29: #{tpu_custom_call.1} parent=1 // pred_fallthru
      _
    // Predicated region
    $region30: #{tpu_custom_call.1} parent=1 // pred_check
      _
    $region31: #{tpu_custom_call.1} parent=1 // pred_check_branch
      %150 = sbr.rel (0) target = $region33
    $region32: #{tpu_custom_call.1} parent=1 // pred_region
      %s152 = ssub.s32 128, 128
      %153 = vsyncadd [#allocation12], %s152
      %s155 = sshll.u32 [#allocation11], 4
      %s156 = int_to_ptr.vmem [resolvable:$true] %s155
      %158 = dma.hbm_to_vmem [thread:$0]  %s15, 128, %s156, [#allocation12]
    $region33: #{tpu_custom_call.1} parent=1 // pred_fallthru
      _
    // Predicated region
    $region34: #{tpu_custom_call.1} parent=1 // pred_check
      _
    $region35: #{tpu_custom_call.1} parent=1 // pred_check_branch
      %160 = sbr.rel (0) target = $region37
    $region36: #{tpu_custom_call.1} parent=1 // pred_region
      _
    $region37: #{tpu_custom_call.1} parent=1 // pred_fallthru
      _
    // Predicated region
    $region38: #{tpu_custom_call.1} parent=1 // pred_check
      _
    $region39: #{tpu_custom_call.1} parent=1 // pred_check_branch
      %162 = sbr.rel (0) target = $region41
    $region40: #{tpu_custom_call.1} parent=1 // pred_region
      _
    $region41: #{tpu_custom_call.1} parent=1 // pred_fallthru
      _
    // Predicated region
    $region42: #{tpu_custom_call.1} parent=1 // pred_check
      _
    $region43: #{tpu_custom_call.1} parent=1 // pred_check_branch
      %164 = sbr.rel (0) target = $region45
    $region44: #{tpu_custom_call.1} parent=1 // pred_region
      %s166 = ssub.s32 128, 128
      %167 = vsyncadd [#allocation12], %s166
      %s169 = sshll.u32 [#allocation13], 4
      %s170 = int_to_ptr.vmem [resolvable:$true] %s169
      %172 = dma.hbm_to_vmem [thread:$0]  %s21, 128, %s170, [#allocation12]
    $region45: #{tpu_custom_call.1} parent=1 // pred_fallthru
      _
    // Predicated region
    $region46: #{tpu_custom_call.1} parent=1 // pred_check
      _
    $region47: #{tpu_custom_call.1} parent=1 // pred_check_branch
      %174 = sbr.rel (0) target = $region49
    $region48: #{tpu_custom_call.1} parent=1 // pred_region
      %s176 = ssub.s32 128, 128
      %177 = vsyncadd [#allocation15], %s176
      %s179 = sshll.u32 [#allocation14], 4
      %s180 = int_to_ptr.vmem [resolvable:$true] %s179
      %182 = dma.hbm_to_vmem [thread:$0]  %s23, 128, %s180, [#allocation15]
    $region49: #{tpu_custom_call.1} parent=1 // pred_fallthru
      _
    // Predicated region
    $region50: #{tpu_custom_call.1} parent=1 // pred_check
      _
    $region51: #{tpu_custom_call.1} parent=1 // pred_check_branch
      %184 = sbr.rel (0) target = $region53
    $region52: #{tpu_custom_call.1} parent=1 // pred_region
      %s186 = ssub.s32 128, 128
      %187 = vsyncadd [#allocation15], %s186
      %s189 = sshll.u32 [#allocation16], 4
      %s190 = int_to_ptr.vmem [resolvable:$true] %s189
      %192 = dma.hbm_to_vmem [thread:$0]  %s25, 128, %s190, [#allocation15]
    $region53: #{tpu_custom_call.1} parent=1 // pred_fallthru
      _
    // Predicated region
    $region54: #{tpu_custom_call.1} parent=1 // pred_check
      _
    $region55: #{tpu_custom_call.1} parent=1 // pred_check_branch
      %194 = sbr.rel (0) target = $region57
    $region56: #{tpu_custom_call.1} parent=1 // pred_region
      _
    $region57: #{tpu_custom_call.1} parent=1 // pred_fallthru
      _
    // Predicated region
    $region58: #{tpu_custom_call.1} parent=1 // pred_check
      _
    $region59: #{tpu_custom_call.1} parent=1 // pred_check_branch
      %196 = sbr.rel (0) target = $region61
    $region60: #{tpu_custom_call.1} parent=1 // pred_region
      %s198 = ssub.s32 128, 128
      %199 = vsyncadd [#allocation18], %s198
      %s201 = sshll.u32 [#allocation17], 4
      %s202 = int_to_ptr.vmem [resolvable:$true] %s201
      %204 = dma.hbm_to_vmem [thread:$0]  %s29, 128, %s202, [#allocation18]
    $region61: #{tpu_custom_call.1} parent=1 // pred_fallthru
      _
    // Predicated region
    $region62: #{tpu_custom_call.1} parent=1 // pred_check
      _
    $region63: #{tpu_custom_call.1} parent=1 // pred_check_branch
      %206 = sbr.rel (0) target = $region65
    $region64: #{tpu_custom_call.1} parent=1 // pred_region
      _
    $region65: #{tpu_custom_call.1} parent=1 // pred_fallthru
      _
    // Predicated region
    $region66: #{tpu_custom_call.1} parent=1 // pred_check
      _
    $region67: #{tpu_custom_call.1} parent=1 // pred_check_branch
      %208 = sbr.rel (0) target = $region69
    $region68: #{tpu_custom_call.1} parent=1 // pred_region
      _
    $region69: #{tpu_custom_call.1} parent=1 // pred_fallthru
      _
    // Predicated region
    $region70: #{tpu_custom_call.1} parent=1 // pred_check
      _
    $region71: #{tpu_custom_call.1} parent=1 // pred_check_branch
      %210 = sbr.rel (0) target = $region73
    $region72: #{tpu_custom_call.1} parent=1 // pred_region
      _
    $region73: #{tpu_custom_call.1} parent=1 // pred_fallthru
      _
    // Predicated region
    $region74: #{tpu_custom_call.1} parent=1 // pred_check
      _
    $region75: #{tpu_custom_call.1} parent=1 // pred_check_branch
      %212 = sbr.rel (0) target = $region77
    $region76: #{tpu_custom_call.1} parent=1 // pred_region
      _
    $region77: #{tpu_custom_call.1} parent=1 // pred_fallthru
      _
    // Predicated region
    $region78: #{tpu_custom_call.1} parent=1 // pred_check
      _
    $region79: #{tpu_custom_call.1} parent=1 // pred_check_branch
      %214 = sbr.rel (0) target = $region81
    $region80: #{tpu_custom_call.1} parent=1 // pred_region
      _
    $region81: #{tpu_custom_call.1} parent=1 // pred_fallthru
      _
    // Predicated region
    $region82: #{tpu_custom_call.1} parent=1 // pred_check
      _
    $region83: #{tpu_custom_call.1} parent=1 // pred_check_branch
      %216 = sbr.rel (0) target = $region85
    $region84: #{tpu_custom_call.1} parent=1 // pred_region
      _
    $region85: #{tpu_custom_call.1} parent=1 // pred_fallthru
      _
    // Predicated region
    $region86: #{tpu_custom_call.1} parent=1 // pred_check
      _
    $region87: #{tpu_custom_call.1} parent=1 // pred_check_branch
      %218 = sbr.rel (0) target = $region89
    $region88: #{tpu_custom_call.1} parent=1 // pred_region
      _
    $region89: #{tpu_custom_call.1} parent=1 // pred_fallthru
      _
    // Predicated region
    $region90: #{tpu_custom_call.1} parent=1 // pred_check
      _
    $region91: #{tpu_custom_call.1} parent=1 // pred_check_branch
      %220 = sbr.rel (0) target = $region93
    $region92: #{tpu_custom_call.1} parent=1 // pred_region
      _
    $region93: #{tpu_custom_call.1} parent=1 // pred_fallthru
      _
    // Predicated region
    $region94: #{tpu_custom_call.1} parent=1 // pred_check
      _
    $region95: #{tpu_custom_call.1} parent=1 // pred_check_branch
      %222 = sbr.rel (0) target = $region97
    $region96: #{tpu_custom_call.1} parent=1 // pred_region
      _
    $region97: #{tpu_custom_call.1} parent=1 // pred_fallthru
      _
    // Predicated region
    $region98: #{tpu_custom_call.1} parent=1 // pred_check
      _
    $region99: #{tpu_custom_call.1} parent=1 // pred_check_branch
      %224 = sbr.rel (0) target = $region101
    $region100: #{tpu_custom_call.1} parent=1 // pred_region
      _
    $region101: #{tpu_custom_call.1} parent=1 // pred_fallthru
      _
    // Predicated region
    $region102: #{tpu_custom_call.1} parent=1 // pred_check
      _
    $region103: #{tpu_custom_call.1} parent=1 // pred_check_branch
      %226 = sbr.rel (0) target = $region105
    $region104: #{tpu_custom_call.1} parent=1 // pred_region
      _
    $region105: #{tpu_custom_call.1} parent=1 // pred_fallthru
      _
    // Predicated region
    $region106: #{tpu_custom_call.1} parent=1 // pred_check
      _
    $region107: #{tpu_custom_call.1} parent=1 // pred_check_branch
      %228 = sbr.rel (0) target = $region109
    $region108: #{tpu_custom_call.1} parent=1 // pred_region
      _
    $region109: #{tpu_custom_call.1} parent=1 // pred_fallthru
      _
    // Predicated region
    $region110: #{tpu_custom_call.1} parent=1 // pred_check
      _
    $region111: #{tpu_custom_call.1} parent=1 // pred_check_branch
      %230 = sbr.rel (0) target = $region113
    $region112: #{tpu_custom_call.1} parent=1 // pred_region
      _
    $region113: #{tpu_custom_call.1} parent=1 // pred_fallthru
      _
    // Predicated region
    $region114: #{tpu_custom_call.1} parent=1 // pred_check
      _
    $region115: #{tpu_custom_call.1} parent=1 // pred_check_branch
      %232 = sbr.rel (0) target = $region117
    $region116: #{tpu_custom_call.1} parent=1 // pred_region
      _
    $region117: #{tpu_custom_call.1} parent=1 // pred_fallthru
      _
    // Predicated region
    $region118: #{tpu_custom_call.1} parent=1 // pred_check
      _
    $region119: #{tpu_custom_call.1} parent=1 // pred_check_branch
      %234 = sbr.rel (0) target = $region121
    $region120: #{tpu_custom_call.1} parent=1 // pred_region
      _
    $region121: #{tpu_custom_call.1} parent=1 // pred_fallthru
      _
    // Predicated region
    $region122: #{tpu_custom_call.1} parent=1 // pred_check
      _
    $region123: #{tpu_custom_call.1} parent=1 // pred_check_branch
      %236 = sbr.rel (0) target = $region125
    $region124: #{tpu_custom_call.1} parent=1 // pred_region
      _
    $region125: #{tpu_custom_call.1} parent=1 // pred_fallthru
      _
    // Predicated region
    $region126: #{tpu_custom_call.1} parent=1 // pred_check
      _
    $region127: #{tpu_custom_call.1} parent=1 // pred_check_branch
      %238 = sbr.rel (0) target = $region129
    $region128: #{tpu_custom_call.1} parent=1 // pred_region
      %239 = dma.done [#allocation3], 128
    $region129: #{tpu_custom_call.1} parent=1 // pred_fallthru
      _
    // Predicated region
    $region130: #{tpu_custom_call.1} parent=1 // pred_check
      _
    $region131: #{tpu_custom_call.1} parent=1 // pred_check_branch
      %241 = sbr.rel (0) target = $region133
    $region132: #{tpu_custom_call.1} parent=1 // pred_region
      %242 = dma.done [#allocation6], 128
    $region133: #{tpu_custom_call.1} parent=1 // pred_fallthru
      _
    // Predicated region
    $region134: #{tpu_custom_call.1} parent=1 // pred_check
      _
    $region135: #{tpu_custom_call.1} parent=1 // pred_check_branch
      %244 = sbr.rel (0) target = $region137
    $region136: #{tpu_custom_call.1} parent=1 // pred_region
      %245 = dma.done [#allocation6], 16
    $region137: #{tpu_custom_call.1} parent=1 // pred_fallthru
      _
    // Predicated region
    $region138: #{tpu_custom_call.1} parent=1 // pred_check
      _
    $region139: #{tpu_custom_call.1} parent=1 // pred_check_branch
      %247 = sbr.rel (0) target = $region141
    $region140: #{tpu_custom_call.1} parent=1 // pred_region
      %248 = dma.done [#allocation9], 16
    $region141: #{tpu_custom_call.1} parent=1 // pred_fallthru
      _
    // Predicated region
    $region142: #{tpu_custom_call.1} parent=1 // pred_check
      _
    $region143: #{tpu_custom_call.1} parent=1 // pred_check_branch
      %250 = sbr.rel (0) target = $region145
    $region144: #{tpu_custom_call.1} parent=1 // pred_region
      %251 = dma.done [#allocation9], 128
    $region145: #{tpu_custom_call.1} parent=1 // pred_fallthru
      _
    // Predicated region
    $region146: #{tpu_custom_call.1} parent=1 // pred_check
      _
    $region147: #{tpu_custom_call.1} parent=1 // pred_check_branch
      %253 = sbr.rel (0) target = $region149
    $region148: #{tpu_custom_call.1} parent=1 // pred_region
      %254 = dma.done [#allocation12], 128
    $region149: #{tpu_custom_call.1} parent=1 // pred_fallthru
      _
    // Predicated region
    $region150: #{tpu_custom_call.1} parent=1 // pred_check
      _
    $region151: #{tpu_custom_call.1} parent=1 // pred_check_branch
      %256 = sbr.rel (0) target = $region153
    $region152: #{tpu_custom_call.1} parent=1 // pred_region
      %257 = dma.done [#allocation12], 128
    $region153: #{tpu_custom_call.1} parent=1 // pred_fallthru
      _
    // Predicated region
    $region154: #{tpu_custom_call.1} parent=1 // pred_check
      _
    $region155: #{tpu_custom_call.1} parent=1 // pred_check_branch
      %259 = sbr.rel (0) target = $region157
    $region156: #{tpu_custom_call.1} parent=1 // pred_region
      %260 = dma.done [#allocation15], 128
    $region157: #{tpu_custom_call.1} parent=1 // pred_fallthru
      _
    // Predicated region
    $region158: #{tpu_custom_call.1} parent=1 // pred_check
      _
    $region159: #{tpu_custom_call.1} parent=1 // pred_check_branch
      %262 = sbr.rel (0) target = $region161
    $region160: #{tpu_custom_call.1} parent=1 // pred_region
      %263 = dma.done [#allocation15], 128
    $region161: #{tpu_custom_call.1} parent=1 // pred_fallthru
      _
    // Predicated region
    $region162: #{tpu_custom_call.1} parent=1 // pred_check
      _
    $region163: #{tpu_custom_call.1} parent=1 // pred_check_branch
      %265 = sbr.rel (0) target = $region165
    $region164: #{tpu_custom_call.1} parent=1 // pred_region
      %266 = dma.done [#allocation18], 128
    $region165: #{tpu_custom_call.1} parent=1 // pred_fallthru
      _
    %v267 = vld [vmem:[#allocation2] sm:$0xff]
    %vm268 = vcmask 261120
    %v269 = vsel %vm268, %v267, 0.0
    %v270 = vrot.slane %v269, 4
    %v271 = vadd.f32 %v269, %v270
    %v272 = vrot.slane %v271, 2
    %v273 = vadd.f32 %v271, %v272
    %v274 = vrot.slane %v273, 1
    %v275 = vadd.f32 %v273, %v274
    %v276 = vrcp.pop 8.0
    %v277 = vmul.f32 %v275, %v276
    %v278 = vsub.f32 %v267, %v277
    %v279 = vmul.f32 %v278, %v278
    %v280 = vsel %vm268, %v279, 0.0
    %v281 = vrot.slane %v280, 4
    %v282 = vadd.f32 %v280, %v281
    %v283 = vrot.slane %v282, 2
    %v284 = vadd.f32 %v282, %v283
    %v285 = vrot.slane %v284, 1
    %v286 = vadd.f32 %v284, %v285
    %v287 = vmul.f32 %v286, %v276
    %v288 = vadd.f32 %v287, 1e-05
    %v289 = vrsqrt.pop %v288
    %v290 = vmul.f32 %v278, %v289
    %v291 = vld [vmem:[%s5] sm:$0xff]
    %v292 = vld [vmem:[%s5 + $0x8] sm:$0xff]
    %v293 = vld [vmem:[%s5 + $0x10] sm:$0xff]
    %v294 = vld [vmem:[%s5 + $0x18] sm:$0xff]
    %v295 = vld [vmem:[#allocation7] sm:$0x1]
    %v297 = vlaneseq
    %v298 = vshrl.u32 %v297, 7
    %v299 = vsub.s32 0, %v298
    %v300 = vrot.slane %v295, %v299
    %v303 = vsel %vm268, %v290, 0
    %305 = vmatprep.subr.mxu0 0.0
    %306 = vmatpush1.msra.mxu0 0.0
    %307 = vmatprep.subr.mxu0 0.0
    %308 = vmatpush1.msra.mxu0 0.0
    %309 = vmatprep.subr.mxu0 0.0
    %310 = vmatpush1.msra.mxu0 0.0
    %311 = vmatprep.subr.mxu0 0.0
    %312 = vmatpush1.msra.mxu0 0.0
    %313 = vmatprep.subr.mxu0 0.0
    %314 = vmatpush1.msra.mxu0 0.0
    %315 = vmatprep.subr.mxu0 0.0
    %316 = vmatpush1.msra.mxu0 0.0
    %317 = vmatprep.subr.mxu0 0.0
    %318 = vmatpush1.msra.mxu0 0.0
    %319 = vmatprep.subr.mxu0 0.0
    %320 = vmatpush1.msra.mxu0 0.0
    %321 = vmatprep.subr.mxu0 0.0
    %322 = vmatpush1.msra.mxu0 0.0
    %323 = vmatprep.subr.mxu0 0.0
    %324 = vmatpush1.msra.mxu0 0.0
    %325 = vmatprep.subr.mxu0 0.0
    %326 = vmatpush1.msra.mxu0 0.0
    %327 = vmatprep.subr.mxu0 0.0
    %328 = vmatpush1.msra.mxu0 0.0
    %329 = vmatprep.subr.mxu0 0.0
    %330 = vmatpush1.msra.mxu0 %v294
    %331 = vmatprep.subr.mxu0 0.0
    %332 = vmatpush1.msra.mxu0 %v293
    %333 = vmatprep.subr.mxu0 0.0
    %334 = vmatpush1.msra.mxu0 %v292
    %335 = vmatprep.subr.mxu0 0.0
    %336 = vmatpush1.msra.mxu0 %v291
    %337 = vmatprep.subr.mxu0 0.0
    %338 = vmatpush2.msra.mxu0 0.0
    %339 = vmatprep.subr.mxu0 0.0
    %340 = vmatpush2.msra.mxu0 0.0
    %341 = vmatprep.subr.mxu0 0.0
    %342 = vmatpush2.msra.mxu0 0.0
    %343 = vmatprep.subr.mxu0 0.0
    %344 = vmatpush2.msra.mxu0 0.0
    %345 = vmatprep.subr.mxu0 0.0
    %346 = vmatpush2.msra.mxu0 0.0
    %347 = vmatprep.subr.mxu0 0.0
    %348 = vmatpush2.msra.mxu0 0.0
    %349 = vmatprep.subr.mxu0 0.0
    %350 = vmatpush2.msra.mxu0 0.0
    %351 = vmatprep.subr.mxu0 0.0
    %352 = vmatpush2.msra.mxu0 0.0
    %353 = vmatprep.subr.mxu0 0.0
    %354 = vmatpush2.msra.mxu0 0.0
    %355 = vmatprep.subr.mxu0 0.0
    %356 = vmatpush2.msra.mxu0 0.0
    %357 = vmatprep.subr.mxu0 0.0
    %358 = vmatpush2.msra.mxu0 0.0
    %359 = vmatprep.subr.mxu0 0.0
    %360 = vmatpush2.msra.mxu0 0.0
    %361 = vmatprep.subr.mxu0 0.0
    %362 = vmatpush2.msra.mxu0 0.0
    %363 = vmatprep.subr.mxu0 0.0
    %364 = vmatpush2.msra.mxu0 0.0
    %365 = vmatprep.subr.mxu0 0.0
    %366 = vmatpush2.msra.mxu0 0.0
    %367 = vmatprep.subr.mxu0 0.0
    %368 = vmatpush2.msra.mxu0 0.0
    %369 = vmatprep.mubr.f32.mxu0 0.0
    %370 = vmatmul.mubr.f32.gmra.mxu0 %v303
    %v371 = vpop.f32.mrf.mxu0
    %v372 = vadd.f32 %v300, %v371
    %v373 = vpop.f32.mrf.mxu0
    %374 = vdwg.mxu0
    %v375 = vmax.f32 %v372, 0.0
    %v376 = vld [vmem:[#allocation5] sm:$0xff]
    %vm377 = vcmask 130048
    %v378 = vsel %vm377, %v376, 0.0
    %v379 = vrot.slane %v378, 4
    %v380 = vadd.f32 %v378, %v379
    %v381 = vrot.slane %v380, 2
    %v382 = vadd.f32 %v380, %v381
    %v383 = vrot.slane %v382, 1
    %v384 = vadd.f32 %v382, %v383
    %v385 = vmul.f32 %v384, %v276
    %v386 = vsub.f32 %v376, %v385
    %v387 = vmul.f32 %v386, %v386
    %v388 = vsel %vm377, %v387, 0.0
    %v389 = vrot.slane %v388, 4
    %v390 = vadd.f32 %v388, %v389
    %v391 = vrot.slane %v390, 2
    %v392 = vadd.f32 %v390, %v391
    %v393 = vrot.slane %v392, 1
    %v394 = vadd.f32 %v392, %v393
    %v395 = vmul.f32 %v394, %v276
    %v396 = vadd.f32 %v395, 1e-05
    %v397 = vrsqrt.pop %v396
    %v398 = vmul.f32 %v386, %v397
    %v399 = vld [vmem:[%s9] sm:$0xff]
    %v400 = vld [vmem:[%s9 + $0x8] sm:$0xff]
    %v401 = vld [vmem:[#allocation8] sm:$0x1]
    %v403 = vlaneseq
    %v404 = vshrl.u32 %v403, 7
    %v405 = vsub.s32 0, %v404
    %v406 = vrot.slane %v401, %v405
    %v409 = vsel %vm377, %v398, 0
    %411 = vmatprep.subr.mxu0 0.0
    %412 = vmatpush1.msra.mxu0 0.0
    %413 = vmatprep.subr.mxu0 0.0
    %414 = vmatpush1.msra.mxu0 0.0
    %415 = vmatprep.subr.mxu0 0.0
    %416 = vmatpush1.msra.mxu0 0.0
    %417 = vmatprep.subr.mxu0 0.0
    %418 = vmatpush1.msra.mxu0 0.0
    %419 = vmatprep.subr.mxu0 0.0
    %420 = vmatpush1.msra.mxu0 0.0
    %421 = vmatprep.subr.mxu0 0.0
    %422 = vmatpush1.msra.mxu0 0.0
    %423 = vmatprep.subr.mxu0 0.0
    %424 = vmatpush1.msra.mxu0 0.0
    %425 = vmatprep.subr.mxu0 0.0
    %426 = vmatpush1.msra.mxu0 0.0
    %427 = vmatprep.subr.mxu0 0.0
    %428 = vmatpush1.msra.mxu0 0.0
    %429 = vmatprep.subr.mxu0 0.0
    %430 = vmatpush1.msra.mxu0 0.0
    %431 = vmatprep.subr.mxu0 0.0
    %432 = vmatpush1.msra.mxu0 0.0
    %433 = vmatprep.subr.mxu0 0.0
    %434 = vmatpush1.msra.mxu0 0.0
    %435 = vmatprep.subr.mxu0 0.0
    %436 = vmatpush1.msra.mxu0 0.0
    %437 = vmatprep.subr.mxu0 0.0
    %438 = vmatpush1.msra.mxu0 0.0
    %439 = vmatprep.subr.mxu0 0.0
    %440 = vmatpush1.msra.mxu0 %v400
    %441 = vmatprep.subr.mxu0 0.0
    %442 = vmatpush1.msra.mxu0 %v399
    %443 = vmatprep.subr.mxu0 0.0
    %444 = vmatpush2.msra.mxu0 0.0
    %445 = vmatprep.subr.mxu0 0.0
    %446 = vmatpush2.msra.mxu0 0.0
    %447 = vmatprep.subr.mxu0 0.0
    %448 = vmatpush2.msra.mxu0 0.0
    %449 = vmatprep.subr.mxu0 0.0
    %450 = vmatpush2.msra.mxu0 0.0
    %451 = vmatprep.subr.mxu0 0.0
    %452 = vmatpush2.msra.mxu0 0.0
    %453 = vmatprep.subr.mxu0 0.0
    %454 = vmatpush2.msra.mxu0 0.0
    %455 = vmatprep.subr.mxu0 0.0
    %456 = vmatpush2.msra.mxu0 0.0
    %457 = vmatprep.subr.mxu0 0.0
    %458 = vmatpush2.msra.mxu0 0.0
    %459 = vmatprep.subr.mxu0 0.0
    %460 = vmatpush2.msra.mxu0 0.0
    %461 = vmatprep.subr.mxu0 0.0
    %462 = vmatpush2.msra.mxu0 0.0
    %463 = vmatprep.subr.mxu0 0.0
    %464 = vmatpush2.msra.mxu0 0.0
    %465 = vmatprep.subr.mxu0 0.0
    %466 = vmatpush2.msra.mxu0 0.0
    %467 = vmatprep.subr.mxu0 0.0
    %468 = vmatpush2.msra.mxu0 0.0
    %469 = vmatprep.subr.mxu0 0.0
    %470 = vmatpush2.msra.mxu0 0.0
    %471 = vmatprep.subr.mxu0 0.0
    %472 = vmatpush2.msra.mxu0 0.0
    %473 = vmatprep.subr.mxu0 0.0
    %474 = vmatpush2.msra.mxu0 0.0
    %475 = vmatprep.mubr.f32.mxu0 0.0
    %476 = vmatmul.mubr.f32.gmra.mxu0 %v409
    %v477 = vpop.f32.mrf.mxu0
    %v478 = vadd.f32 %v406, %v477
    %v479 = vpop.f32.mrf.mxu0
    %480 = vdwg.mxu0
    %v481 = vmax.f32 %v478, 0.0
    %482 = vst.msk [vmem:[#allocation19] sm:$0xff] %vm268, %v375
    %483 = vst.msk [vmem:[#allocation20] sm:$0xff] %vm268, %v481
    %v484 = vld [vmem:[#allocation10] sm:$0xff]
    %v485 = vld [vmem:[#allocation11] sm:$0xff]
    %v486 = vmul.f32 %v485, 0.5
    %v487 = vadd.f32 %v484, %v486
    %v488 = vmax.f32 %v487, 0.0
    %v489 = vld [vmem:[%s17] sm:$0xff]
    %v490 = vld [vmem:[%s17 + $0x8] sm:$0xff]
    %v491 = vld [vmem:[%s19] sm:$0xff]
    %v492 = vld [vmem:[%s19 + $0x8] sm:$0xff]
    %v493 = vmul.f32 %v491, 0.5
    %v494 = vmul.f32 %v492, 0.5
    %v495 = vadd.f32 %v489, %v493
    %v496 = vadd.f32 %v490, %v494
    %v497 = vmax.f32 %v495, 0.0
    %v498 = vmax.f32 %v496, 0.0
    %v499 = vld [vmem:[#allocation13] sm:$0xff]
    %v500 = vld [vmem:[#allocation14] sm:$0xff]
    %v501 = vld [vmem:[%s27] sm:$0xff]
    %v502 = vld [vmem:[%s27 + $0x8] sm:$0xff]
    %v503 = vld [vmem:[#allocation16] sm:$0xff]
    %v504 = vmul.f32 %v500, %v503
    %vm505 = vcmask 64512
    %v507 = vsel %vm505, %v501, 0
    %v510 = vsel %vm505, %v502, 0
    %512 = vmatprep.subr.mxu0 0.0
    %513 = vmatpush1.msra.mxu0 0.0
    %514 = vmatprep.subr.mxu0 0.0
    %515 = vmatpush1.msra.mxu0 0.0
    %516 = vmatprep.subr.mxu0 0.0
    %517 = vmatpush1.msra.mxu0 0.0
    %518 = vmatprep.subr.mxu0 0.0
    %519 = vmatpush1.msra.mxu0 0.0
    %520 = vmatprep.subr.mxu0 0.0
    %521 = vmatpush1.msra.mxu0 0.0
    %522 = vmatprep.subr.mxu0 0.0
    %523 = vmatpush1.msra.mxu0 0.0
    %524 = vmatprep.subr.mxu0 0.0
    %525 = vmatpush1.msra.mxu0 0.0
    %526 = vmatprep.subr.mxu0 0.0
    %527 = vmatpush1.msra.mxu0 0.0
    %528 = vmatprep.subr.mxu0 0.0
    %529 = vmatpush1.msra.mxu0 0.0
    %530 = vmatprep.subr.mxu0 0.0
    %531 = vmatpush1.msra.mxu0 0.0
    %532 = vmatprep.subr.mxu0 0.0
    %533 = vmatpush1.msra.mxu0 0.0
    %534 = vmatprep.subr.mxu0 0.0
    %535 = vmatpush1.msra.mxu0 0.0
    %536 = vmatprep.subr.mxu0 0.0
    %537 = vmatpush1.msra.mxu0 0.0
    %538 = vmatprep.subr.mxu0 0.0
    %539 = vmatpush1.msra.mxu0 0.0
    %540 = vmatprep.subr.mxu0 0.0
    %541 = vmatpush1.msra.mxu0 0.0
    %542 = vmatprep.subr.mxu0 0.0
    %543 = vmatpush1.msra.mxu0 %v504
    %544 = vmatprep.subr.mxu0 0.0
    %545 = vmatpush2.msra.mxu0 0.0
    %546 = vmatprep.subr.mxu0 0.0
    %547 = vmatpush2.msra.mxu0 0.0
    %548 = vmatprep.subr.mxu0 0.0
    %549 = vmatpush2.msra.mxu0 0.0
    %550 = vmatprep.subr.mxu0 0.0
    %551 = vmatpush2.msra.mxu0 0.0
    %552 = vmatprep.subr.mxu0 0.0
    %553 = vmatpush2.msra.mxu0 0.0
    %554 = vmatprep.subr.mxu0 0.0
    %555 = vmatpush2.msra.mxu0 0.0
    %556 = vmatprep.subr.mxu0 0.0
    %557 = vmatpush2.msra.mxu0 0.0
    %558 = vmatprep.subr.mxu0 0.0
    %559 = vmatpush2.msra.mxu0 0.0
    %560 = vmatprep.subr.mxu0 0.0
    %561 = vmatpush2.msra.mxu0 0.0
    %562 = vmatprep.subr.mxu0 0.0
    %563 = vmatpush2.msra.mxu0 0.0
    %564 = vmatprep.subr.mxu0 0.0
    %565 = vmatpush2.msra.mxu0 0.0
    %566 = vmatprep.subr.mxu0 0.0
    %567 = vmatpush2.msra.mxu0 0.0
    %568 = vmatprep.subr.mxu0 0.0
    %569 = vmatpush2.msra.mxu0 0.0
    %570 = vmatprep.subr.mxu0 0.0
    %571 = vmatpush2.msra.mxu0 0.0
    %572 = vmatprep.subr.mxu0 0.0
    %573 = vmatpush2.msra.mxu0 0.0
    %574 = vmatprep.subr.mxu0 0.0
    %575 = vmatpush2.msra.mxu0 0.0
    %576 = vmatprep.mubr.f32.mxu0 0.0
    %577 = vmatmul.mubr.f32.gmra.mxu0 %v507
    %v578 = vpop.f32.mrf.mxu0
    %v579 = vadd.f32 0.0, %v578
    %v580 = vpop.f32.mrf.mxu0
    %581 = vmatprep.mubr.f32.mxu0 0.0
    %582 = vmatmul.mubr.f32.gmra.mxu0 %v510
    %v583 = vpop.f32.mrf.mxu0
    %v584 = vadd.f32 0.0, %v583
    %v585 = vpop.f32.mrf.mxu0
    %586 = vdwg.mxu0
    %v587 = vld [vmem:[%s33] sm:$0xff]
    %v588 = vld [vmem:[%s33 + $0x8] sm:$0xff]
    %v590 = vsel %vm377, %v500, 0
    %592 = vmatprep.subr.mxu0 0.0
    %593 = vmatpush1.msra.mxu0 0.0
    %594 = vmatprep.subr.mxu0 0.0
    %595 = vmatpush1.msra.mxu0 0.0
    %596 = vmatprep.subr.mxu0 0.0
    %597 = vmatpush1.msra.mxu0 0.0
    %598 = vmatprep.subr.mxu0 0.0
    %599 = vmatpush1.msra.mxu0 0.0
    %600 = vmatprep.subr.mxu0 0.0
    %601 = vmatpush1.msra.mxu0 0.0
    %602 = vmatprep.subr.mxu0 0.0
    %603 = vmatpush1.msra.mxu0 0.0
    %604 = vmatprep.subr.mxu0 0.0
    %605 = vmatpush1.msra.mxu0 0.0
    %606 = vmatprep.subr.mxu0 0.0
    %607 = vmatpush1.msra.mxu0 0.0
    %608 = vmatprep.subr.mxu0 0.0
    %609 = vmatpush1.msra.mxu0 0.0
    %610 = vmatprep.subr.mxu0 0.0
    %611 = vmatpush1.msra.mxu0 0.0
    %612 = vmatprep.subr.mxu0 0.0
    %613 = vmatpush1.msra.mxu0 0.0
    %614 = vmatprep.subr.mxu0 0.0
    %615 = vmatpush1.msra.mxu0 0.0
    %616 = vmatprep.subr.mxu0 0.0
    %617 = vmatpush1.msra.mxu0 0.0
    %618 = vmatprep.subr.mxu0 0.0
    %619 = vmatpush1.msra.mxu0 0.0
    %620 = vmatprep.subr.mxu0 0.0
    %621 = vmatpush1.msra.mxu0 %v588
    %622 = vmatprep.subr.mxu0 0.0
    %623 = vmatpush1.msra.mxu0 %v587
    %624 = vmatprep.subr.mxu0 0.0
    %625 = vmatpush2.msra.mxu0 0.0
    %626 = vmatprep.subr.mxu0 0.0
    %627 = vmatpush2.msra.mxu0 0.0
    %628 = vmatprep.subr.mxu0 0.0
    %629 = vmatpush2.msra.mxu0 0.0
    %630 = vmatprep.subr.mxu0 0.0
    %631 = vmatpush2.msra.mxu0 0.0
    %632 = vmatprep.subr.mxu0 0.0
    %633 = vmatpush2.msra.mxu0 0.0
    %634 = vmatprep.subr.mxu0 0.0
    %635 = vmatpush2.msra.mxu0 0.0
    %636 = vmatprep.subr.mxu0 0.0
    %637 = vmatpush2.msra.mxu0 0.0
    %638 = vmatprep.subr.mxu0 0.0
    %639 = vmatpush2.msra.mxu0 0.0
    %640 = vmatprep.subr.mxu0 0.0
    %641 = vmatpush2.msra.mxu0 0.0
    %642 = vmatprep.subr.mxu0 0.0
    %643 = vmatpush2.msra.mxu0 0.0
    %644 = vmatprep.subr.mxu0 0.0
    %645 = vmatpush2.msra.mxu0 0.0
    %646 = vmatprep.subr.mxu0 0.0
    %647 = vmatpush2.msra.mxu0 0.0
    %648 = vmatprep.subr.mxu0 0.0
    %649 = vmatpush2.msra.mxu0 0.0
    %650 = vmatprep.subr.mxu0 0.0
    %651 = vmatpush2.msra.mxu0 0.0
    %652 = vmatprep.subr.mxu0 0.0
    %653 = vmatpush2.msra.mxu0 0.0
    %654 = vmatprep.subr.mxu0 0.0
    %655 = vmatpush2.msra.mxu0 0.0
    %656 = vmatprep.mubr.f32.mxu0 0.0
    %657 = vmatmul.mubr.f32.gmra.mxu0 %v590
    %v658 = vpop.f32.mrf.mxu0
    %v659 = vadd.f32 0.0, %v658
    %v660 = vpop.f32.mrf.mxu0
    %661 = vdwg.mxu0
    %v663 = vsel %vm377, %v579, 0
    %v666 = vsel %vm377, %v584, 0
    %668 = vmatprep.subr.mxu0 0.0
    %669 = vmatpush1.msra.mxu0 0.0
    %670 = vmatprep.subr.mxu0 0.0
    %671 = vmatpush1.msra.mxu0 0.0
    %672 = vmatprep.subr.mxu0 0.0
    %673 = vmatpush1.msra.mxu0 0.0
    %674 = vmatprep.subr.mxu0 0.0
    %675 = vmatpush1.msra.mxu0 0.0
    %676 = vmatprep.subr.mxu0 0.0
    %677 = vmatpush1.msra.mxu0 0.0
    %678 = vmatprep.subr.mxu0 0.0
    %679 = vmatpush1.msra.mxu0 0.0
    %680 = vmatprep.subr.mxu0 0.0
    %681 = vmatpush1.msra.mxu0 0.0
    %682 = vmatprep.subr.mxu0 0.0
    %683 = vmatpush1.msra.mxu0 0.0
    %684 = vmatprep.subr.mxu0 0.0
    %685 = vmatpush1.msra.mxu0 0.0
    %686 = vmatprep.subr.mxu0 0.0
    %687 = vmatpush1.msra.mxu0 0.0
    %688 = vmatprep.subr.mxu0 0.0
    %689 = vmatpush1.msra.mxu0 0.0
    %690 = vmatprep.subr.mxu0 0.0
    %691 = vmatpush1.msra.mxu0 0.0
    %692 = vmatprep.subr.mxu0 0.0
    %693 = vmatpush1.msra.mxu0 0.0
    %694 = vmatprep.subr.mxu0 0.0
    %695 = vmatpush1.msra.mxu0 0.0
    %696 = vmatprep.subr.mxu0 0.0
    %697 = vmatpush1.msra.mxu0 %v588
    %698 = vmatprep.subr.mxu0 0.0
    %699 = vmatpush1.msra.mxu0 %v587
    %700 = vmatprep.subr.mxu0 0.0
    %701 = vmatpush2.msra.mxu0 0.0
    %702 = vmatprep.subr.mxu0 0.0
    %703 = vmatpush2.msra.mxu0 0.0
    %704 = vmatprep.subr.mxu0 0.0
    %705 = vmatpush2.msra.mxu0 0.0
    %706 = vmatprep.subr.mxu0 0.0
    %707 = vmatpush2.msra.mxu0 0.0
    %708 = vmatprep.subr.mxu0 0.0
    %709 = vmatpush2.msra.mxu0 0.0
    %710 = vmatprep.subr.mxu0 0.0
    %711 = vmatpush2.msra.mxu0 0.0
    %712 = vmatprep.subr.mxu0 0.0
    %713 = vmatpush2.msra.mxu0 0.0
    %714 = vmatprep.subr.mxu0 0.0
    %715 = vmatpush2.msra.mxu0 0.0
    %716 = vmatprep.subr.mxu0 0.0
    %717 = vmatpush2.msra.mxu0 0.0
    %718 = vmatprep.subr.mxu0 0.0
    %719 = vmatpush2.msra.mxu0 0.0
    %720 = vmatprep.subr.mxu0 0.0
    %721 = vmatpush2.msra.mxu0 0.0
    %722 = vmatprep.subr.mxu0 0.0
    %723 = vmatpush2.msra.mxu0 0.0
    %724 = vmatprep.subr.mxu0 0.0
    %725 = vmatpush2.msra.mxu0 0.0
    %726 = vmatprep.subr.mxu0 0.0
    %727 = vmatpush2.msra.mxu0 0.0
    %728 = vmatprep.subr.mxu0 0.0
    %729 = vmatpush2.msra.mxu0 0.0
    %730 = vmatprep.subr.mxu0 0.0
    %731 = vmatpush2.msra.mxu0 0.0
    %732 = vmatprep.mubr.f32.mxu0 0.0
    %733 = vmatmul.mubr.f32.gmra.mxu0 %v663
    %v734 = vpop.f32.mrf.mxu0
    %v735 = vadd.f32 0.0, %v734
    %v736 = vpop.f32.mrf.mxu0
    %737 = vmatprep.mubr.f32.mxu0 0.0
    %738 = vmatmul.mubr.f32.gmra.mxu0 %v666
    %v739 = vpop.f32.mrf.mxu0
    %v740 = vadd.f32 0.0, %v739
    %v741 = vpop.f32.mrf.mxu0
    %742 = vdwg.mxu0
    %v743 = vsel %vm505, %v488, 0.0
    %744 = vadd.xlane.f32.xlu0 %v743
    %v745 = vpop.xlane.xlu0 %744
    %v746 = vsel %vm377, %v499, 0.0
    %747 = vadd.xlane.f32.xlu0 %v746
    %v748 = vpop.xlane.xlu0 %747
    %v749 = vadd.f32 %v745, %v748
    %v750 = vrsqrt.pop %v749
    %751 = vxpose.xlu0.b32.start [1/16] %v488, 128
    %752 = vxpose.xlu0.b32.cont [2/16] 0.0, 128
    %753 = vxpose.xlu0.b32.cont [3/16] 0.0, 128
    %754 = vxpose.xlu0.b32.cont [4/16] 0.0, 128
    %755 = vxpose.xlu0.b32.cont [5/16] 0.0, 128
    %756 = vxpose.xlu0.b32.cont [6/16] 0.0, 128
    %757 = vxpose.xlu0.b32.cont [7/16] 0.0, 128
    %758 = vxpose.xlu0.b32.cont [8/16] 0.0, 128
    %759 = vxpose.xlu0.b32.cont [9/16] 0.0, 128
    %760 = vxpose.xlu0.b32.cont [10/16] 0.0, 128
    %761 = vxpose.xlu0.b32.cont [11/16] 0.0, 128
    %762 = vxpose.xlu0.b32.cont [12/16] 0.0, 128
    %763 = vxpose.xlu0.b32.cont [13/16] 0.0, 128
    %764 = vxpose.xlu0.b32.cont [14/16] 0.0, 128
    %765 = vxpose.xlu0.b32.cont [15/16] 0.0, 128
    %766 = vxpose.xlu0.b32.end [16/16] 0.0, 128
    %v767 = vpop.trf.xlu0
    %v768 = vpop.trf.xlu0
    %v769 = vpop.trf.xlu0
    %v770 = vpop.trf.xlu0
    %v771 = vpop.trf.xlu0
    %v772 = vpop.trf.xlu0
    %v773 = vpop.trf.xlu0
    %v774 = vpop.trf.xlu0
    %v775 = vpop.trf.xlu0
    %v776 = vpop.trf.xlu0
    %v777 = vpop.trf.xlu0
    %v778 = vpop.trf.xlu0
    %v779 = vpop.trf.xlu0
    %v780 = vpop.trf.xlu0
    %v781 = vpop.trf.xlu0
    %v782 = vpop.trf.xlu0
    %v783 = vmul.f32 %v750, %v659
    %v784 = vsel %vm377, %v735, 0.0
    %v785 = vsel %vm377, %v740, 0.0
    %v786 = vadd.f32 %v784, %v785
    %v787 = vrot.slane %v786, 4
    %v788 = vadd.f32 %v786, %v787
    %v789 = vrot.slane %v788, 2
    %v790 = vadd.f32 %v788, %v789
    %v791 = vrot.slane %v790, 1
    %v792 = vadd.f32 %v790, %v791
    %v793 = vmul.f32 %v792, 0.20412415
    %v795 = vsel %vm505, %v767, 0
    %797 = vmatprep.subr.mxu0 0.0
    %798 = vmatpush1.msra.mxu0 0.0
    %799 = vmatprep.subr.mxu0 0.0
    %800 = vmatpush1.msra.mxu0 0.0
    %801 = vmatprep.subr.mxu0 0.0
    %802 = vmatpush1.msra.mxu0 0.0
    %803 = vmatprep.subr.mxu0 0.0
    %804 = vmatpush1.msra.mxu0 0.0
    %805 = vmatprep.subr.mxu0 0.0
    %806 = vmatpush1.msra.mxu0 0.0
    %807 = vmatprep.subr.mxu0 0.0
    %808 = vmatpush1.msra.mxu0 0.0
    %809 = vmatprep.subr.mxu0 0.0
    %810 = vmatpush1.msra.mxu0 0.0
    %811 = vmatprep.subr.mxu0 0.0
    %812 = vmatpush1.msra.mxu0 0.0
    %813 = vmatprep.subr.mxu0 0.0
    %814 = vmatpush1.msra.mxu0 0.0
    %815 = vmatprep.subr.mxu0 0.0
    %816 = vmatpush1.msra.mxu0 0.0
    %817 = vmatprep.subr.mxu0 0.0
    %818 = vmatpush1.msra.mxu0 0.0
    %819 = vmatprep.subr.mxu0 0.0
    %820 = vmatpush1.msra.mxu0 0.0
    %821 = vmatprep.subr.mxu0 0.0
    %822 = vmatpush1.msra.mxu0 0.0
    %823 = vmatprep.subr.mxu0 0.0
    %824 = vmatpush1.msra.mxu0 0.0
    %825 = vmatprep.subr.mxu0 0.0
    %826 = vmatpush1.msra.mxu0 0.0
    %827 = vmatprep.subr.mxu0 0.0
    %828 = vmatpush1.msra.mxu0 %v783
    %829 = vmatprep.subr.mxu0 0.0
    %830 = vmatpush2.msra.mxu0 0.0
    %831 = vmatprep.subr.mxu0 0.0
    %832 = vmatpush2.msra.mxu0 0.0
    %833 = vmatprep.subr.mxu0 0.0
    %834 = vmatpush2.msra.mxu0 0.0
    %835 = vmatprep.subr.mxu0 0.0
    %836 = vmatpush2.msra.mxu0 0.0
    %837 = vmatprep.subr.mxu0 0.0
    %838 = vmatpush2.msra.mxu0 0.0
    %839 = vmatprep.subr.mxu0 0.0
    %840 = vmatpush2.msra.mxu0 0.0
    %841 = vmatprep.subr.mxu0 0.0
    %842 = vmatpush2.msra.mxu0 0.0
    %843 = vmatprep.subr.mxu0 0.0
    %844 = vmatpush2.msra.mxu0 0.0
    %845 = vmatprep.subr.mxu0 0.0
    %846 = vmatpush2.msra.mxu0 0.0
    %847 = vmatprep.subr.mxu0 0.0
    %848 = vmatpush2.msra.mxu0 0.0
    %849 = vmatprep.subr.mxu0 0.0
    %850 = vmatpush2.msra.mxu0 0.0
    %851 = vmatprep.subr.mxu0 0.0
    %852 = vmatpush2.msra.mxu0 0.0
    %853 = vmatprep.subr.mxu0 0.0
    %854 = vmatpush2.msra.mxu0 0.0
    %855 = vmatprep.subr.mxu0 0.0
    %856 = vmatpush2.msra.mxu0 0.0
    %857 = vmatprep.subr.mxu0 0.0
    %858 = vmatpush2.msra.mxu0 0.0
    %859 = vmatprep.subr.mxu0 0.0
    %860 = vmatpush2.msra.mxu0 0.0
    %861 = vmatprep.mubr.f32.mxu0 0.0
    %862 = vmatmul.mubr.f32.gmra.mxu0 %v795
    %v863 = vpop.f32.mrf.mxu0
    %v864 = vadd.f32 %v793, %v863
    %v865 = vpop.f32.mrf.mxu0
    %866 = vdwg.mxu0
    %v867 = vmul.f32 %v750, %v864
    %v868 = vld [vmem:[%s31] sm:$0xff]
    %v869 = vld [vmem:[%s31 + $0x8] sm:$0xff]
    %v870 = vmul.f32 %v497, %v868
    %v871 = vmul.f32 %v498, %v869
    %872 = vxpose.xlu0.b32.start [1/16] %v870, 128
    %873 = vxpose.xlu0.b32.cont [2/16] %v871, 128
    %874 = vxpose.xlu0.b32.cont [3/16] 0.0, 128
    %875 = vxpose.xlu0.b32.cont [4/16] 0.0, 128
    %876 = vxpose.xlu0.b32.cont [5/16] 0.0, 128
    %877 = vxpose.xlu0.b32.cont [6/16] 0.0, 128
    %878 = vxpose.xlu0.b32.cont [7/16] 0.0, 128
    %879 = vxpose.xlu0.b32.cont [8/16] 0.0, 128
    %880 = vxpose.xlu0.b32.cont [9/16] 0.0, 128
    %881 = vxpose.xlu0.b32.cont [10/16] 0.0, 128
    %882 = vxpose.xlu0.b32.cont [11/16] 0.0, 128
    %883 = vxpose.xlu0.b32.cont [12/16] 0.0, 128
    %884 = vxpose.xlu0.b32.cont [13/16] 0.0, 128
    %885 = vxpose.xlu0.b32.cont [14/16] 0.0, 128
    %886 = vxpose.xlu0.b32.cont [15/16] 0.0, 128
    %887 = vxpose.xlu0.b32.end [16/16] 0.0, 128
    %v888 = vpop.trf.xlu0
    %v889 = vpop.trf.xlu0
    %v890 = vpop.trf.xlu0
    %v891 = vpop.trf.xlu0
    %v892 = vpop.trf.xlu0
    %v893 = vpop.trf.xlu0
    %v894 = vpop.trf.xlu0
    %v895 = vpop.trf.xlu0
    %v896 = vpop.trf.xlu0
    %v897 = vpop.trf.xlu0
    %v898 = vpop.trf.xlu0
    %v899 = vpop.trf.xlu0
    %v900 = vpop.trf.xlu0
    %v901 = vpop.trf.xlu0
    %v902 = vpop.trf.xlu0
    %v903 = vpop.trf.xlu0
    %904 = vxpose.xlu0.b32.start [1/16] %v499, 128
    %905 = vxpose.xlu0.b32.cont [2/16] 0.0, 128
    %906 = vxpose.xlu0.b32.cont [3/16] 0.0, 128
    %907 = vxpose.xlu0.b32.cont [4/16] 0.0, 128
    %908 = vxpose.xlu0.b32.cont [5/16] 0.0, 128
    %909 = vxpose.xlu0.b32.cont [6/16] 0.0, 128
    %910 = vxpose.xlu0.b32.cont [7/16] 0.0, 128
    %911 = vxpose.xlu0.b32.cont [8/16] 0.0, 128
    %912 = vxpose.xlu0.b32.cont [9/16] 0.0, 128
    %913 = vxpose.xlu0.b32.cont [10/16] 0.0, 128
    %914 = vxpose.xlu0.b32.cont [11/16] 0.0, 128
    %915 = vxpose.xlu0.b32.cont [12/16] 0.0, 128
    %916 = vxpose.xlu0.b32.cont [13/16] 0.0, 128
    %917 = vxpose.xlu0.b32.cont [14/16] 0.0, 128
    %918 = vxpose.xlu0.b32.cont [15/16] 0.0, 128
    %919 = vxpose.xlu0.b32.end [16/16] 0.0, 128
    %v920 = vpop.trf.xlu0
    %v921 = vpop.trf.xlu0
    %v922 = vpop.trf.xlu0
    %v923 = vpop.trf.xlu0
    %v924 = vpop.trf.xlu0
    %v925 = vpop.trf.xlu0
    %v926 = vpop.trf.xlu0
    %v927 = vpop.trf.xlu0
    %v928 = vpop.trf.xlu0
    %v929 = vpop.trf.xlu0
    %v930 = vpop.trf.xlu0
    %v931 = vpop.trf.xlu0
    %v932 = vpop.trf.xlu0
    %v933 = vpop.trf.xlu0
    %v934 = vpop.trf.xlu0
    %v935 = vpop.trf.xlu0
    %v936 = vld [vmem:[#allocation17] sm:$0xff]
    %v937 = vsel %vm377, %v870, 0.0
    %938 = vadd.xlane.f32.xlu0 %v937
    %v939 = vpop.xlane.xlu0 %938
    %v940 = vsel %vm377, %v871, 0.0
    %941 = vadd.xlane.f32.xlu0 %v940
    %v942 = vpop.xlane.xlu0 %941
    %v943 = vsel %vm505, %v920, 0.0
    %944 = vadd.xlane.f32.xlu0 %v943
    %v945 = vpop.xlane.xlu0 %944
    %v946 = vsel %vm505, %v921, 0.0
    %947 = vadd.xlane.f32.xlu0 %v946
    %v948 = vpop.xlane.xlu0 %947
    %v949 = vadd.f32 %v939, %v945
    %v950 = vadd.f32 %v942, %v948
    %v951 = vrsqrt.pop %v949
    %v952 = vrsqrt.pop %v950
    %vm953 = vcmask 195584
    %v954 = vsel %vm953, %v936, 0.0
    %955 = vadd.xlane.f32.xlu0 %v954
    %v956 = vpop.xlane.xlu0 %955
    %v957 = vrsqrt.pop %v956
    %958 = vxpose.xlu0.b32.start [1/16] %v936, 128
    %959 = vxpose.xlu0.b32.cont [2/16] 0.0, 128
    %960 = vxpose.xlu0.b32.cont [3/16] 0.0, 128
    %961 = vxpose.xlu0.b32.cont [4/16] 0.0, 128
    %962 = vxpose.xlu0.b32.cont [5/16] 0.0, 128
    %963 = vxpose.xlu0.b32.cont [6/16] 0.0, 128
    %964 = vxpose.xlu0.b32.cont [7/16] 0.0, 128
    %965 = vxpose.xlu0.b32.cont [8/16] 0.0, 128
    %966 = vxpose.xlu0.b32.cont [9/16] 0.0, 128
    %967 = vxpose.xlu0.b32.cont [10/16] 0.0, 128
    %968 = vxpose.xlu0.b32.cont [11/16] 0.0, 128
    %969 = vxpose.xlu0.b32.cont [12/16] 0.0, 128
    %970 = vxpose.xlu0.b32.cont [13/16] 0.0, 128
    %971 = vxpose.xlu0.b32.cont [14/16] 0.0, 128
    %972 = vxpose.xlu0.b32.cont [15/16] 0.0, 128
    %973 = vxpose.xlu0.b32.end [16/16] 0.0, 128
    %v974 = vpop.trf.xlu0
    %v975 = vpop.trf.xlu0
    %v976 = vpop.trf.xlu0
    %v977 = vpop.trf.xlu0
    %v978 = vpop.trf.xlu0
    %v979 = vpop.trf.xlu0
    %v980 = vpop.trf.xlu0
    %v981 = vpop.trf.xlu0
    %v982 = vpop.trf.xlu0
    %v983 = vpop.trf.xlu0
    %v984 = vpop.trf.xlu0
    %v985 = vpop.trf.xlu0
    %v986 = vpop.trf.xlu0
    %v987 = vpop.trf.xlu0
    %v988 = vpop.trf.xlu0
    %v989 = vpop.trf.xlu0
    %v990 = vmul.f32 %v951, %v735
    %v991 = vmul.f32 %v952, %v740
    %v992 = vmul.f32 %v957, %v659
    %v994 = vsel %vm505, %v974, 0
    %v997 = vsel %vm505, %v975, 0
    %999 = vmatprep.subr.mxu0 0.0
    %1000 = vmatpush1.msra.mxu0 0.0
    %1001 = vmatprep.subr.mxu0 0.0
    %1002 = vmatpush1.msra.mxu0 0.0
    %1003 = vmatprep.subr.mxu0 0.0
    %1004 = vmatpush1.msra.mxu0 0.0
    %1005 = vmatprep.subr.mxu0 0.0
    %1006 = vmatpush1.msra.mxu0 0.0
    %1007 = vmatprep.subr.mxu0 0.0
    %1008 = vmatpush1.msra.mxu0 0.0
    %1009 = vmatprep.subr.mxu0 0.0
    %1010 = vmatpush1.msra.mxu0 0.0
    %1011 = vmatprep.subr.mxu0 0.0
    %1012 = vmatpush1.msra.mxu0 0.0
    %1013 = vmatprep.subr.mxu0 0.0
    %1014 = vmatpush1.msra.mxu0 0.0
    %1015 = vmatprep.subr.mxu0 0.0
    %1016 = vmatpush1.msra.mxu0 0.0
    %1017 = vmatprep.subr.mxu0 0.0
    %1018 = vmatpush1.msra.mxu0 0.0
    %1019 = vmatprep.subr.mxu0 0.0
    %1020 = vmatpush1.msra.mxu0 0.0
    %1021 = vmatprep.subr.mxu0 0.0
    %1022 = vmatpush1.msra.mxu0 0.0
    %1023 = vmatprep.subr.mxu0 0.0
    %1024 = vmatpush1.msra.mxu0 0.0
    %1025 = vmatprep.subr.mxu0 0.0
    %1026 = vmatpush1.msra.mxu0 0.0
    %1027 = vmatprep.subr.mxu0 0.0
    %1028 = vmatpush1.msra.mxu0 0.0
    %1029 = vmatprep.subr.mxu0 0.0
    %1030 = vmatpush1.msra.mxu0 %v992
    %1031 = vmatprep.subr.mxu0 0.0
    %1032 = vmatpush2.msra.mxu0 0.0
    %1033 = vmatprep.subr.mxu0 0.0
    %1034 = vmatpush2.msra.mxu0 0.0
    %1035 = vmatprep.subr.mxu0 0.0
    %1036 = vmatpush2.msra.mxu0 0.0
    %1037 = vmatprep.subr.mxu0 0.0
    %1038 = vmatpush2.msra.mxu0 0.0
    %1039 = vmatprep.subr.mxu0 0.0
    %1040 = vmatpush2.msra.mxu0 0.0
    %1041 = vmatprep.subr.mxu0 0.0
    %1042 = vmatpush2.msra.mxu0 0.0
    %1043 = vmatprep.subr.mxu0 0.0
    %1044 = vmatpush2.msra.mxu0 0.0
    %1045 = vmatprep.subr.mxu0 0.0
    %1046 = vmatpush2.msra.mxu0 0.0
    %1047 = vmatprep.subr.mxu0 0.0
    %1048 = vmatpush2.msra.mxu0 0.0
    %1049 = vmatprep.subr.mxu0 0.0
    %1050 = vmatpush2.msra.mxu0 0.0
    %1051 = vmatprep.subr.mxu0 0.0
    %1052 = vmatpush2.msra.mxu0 0.0
    %1053 = vmatprep.subr.mxu0 0.0
    %1054 = vmatpush2.msra.mxu0 0.0
    %1055 = vmatprep.subr.mxu0 0.0
    %1056 = vmatpush2.msra.mxu0 0.0
    %1057 = vmatprep.subr.mxu0 0.0
    %1058 = vmatpush2.msra.mxu0 0.0
    %1059 = vmatprep.subr.mxu0 0.0
    %1060 = vmatpush2.msra.mxu0 0.0
    %1061 = vmatprep.subr.mxu0 0.0
    %1062 = vmatpush2.msra.mxu0 0.0
    %1063 = vmatprep.mubr.f32.mxu0 0.0
    %1064 = vmatmul.mubr.f32.gmra.mxu0 %v994
    %v1065 = vpop.f32.mrf.mxu0
    %v1066 = vadd.f32 0.0, %v1065
    %v1067 = vpop.f32.mrf.mxu0
    %1068 = vmatprep.mubr.f32.mxu0 0.0
    %1069 = vmatmul.mubr.f32.gmra.mxu0 %v997
    %v1070 = vpop.f32.mrf.mxu0
    %v1071 = vadd.f32 0.0, %v1070
    %v1072 = vpop.f32.mrf.mxu0
    %1073 = vdwg.mxu0
    %v1075 = vsel %vm377, %v888, 0
    %v1078 = vsel %vm377, %v889, 0
    %1080 = vmatprep.subr.mxu0 0.0
    %1081 = vmatpush1.msra.mxu0 0.0
    %1082 = vmatprep.subr.mxu0 0.0
    %1083 = vmatpush1.msra.mxu0 0.0
    %1084 = vmatprep.subr.mxu0 0.0
    %1085 = vmatpush1.msra.mxu0 0.0
    %1086 = vmatprep.subr.mxu0 0.0
    %1087 = vmatpush1.msra.mxu0 0.0
    %1088 = vmatprep.subr.mxu0 0.0
    %1089 = vmatpush1.msra.mxu0 0.0
    %1090 = vmatprep.subr.mxu0 0.0
    %1091 = vmatpush1.msra.mxu0 0.0
    %1092 = vmatprep.subr.mxu0 0.0
    %1093 = vmatpush1.msra.mxu0 0.0
    %1094 = vmatprep.subr.mxu0 0.0
    %1095 = vmatpush1.msra.mxu0 0.0
    %1096 = vmatprep.subr.mxu0 0.0
    %1097 = vmatpush1.msra.mxu0 0.0
    %1098 = vmatprep.subr.mxu0 0.0
    %1099 = vmatpush1.msra.mxu0 0.0
    %1100 = vmatprep.subr.mxu0 0.0
    %1101 = vmatpush1.msra.mxu0 0.0
    %1102 = vmatprep.subr.mxu0 0.0
    %1103 = vmatpush1.msra.mxu0 0.0
    %1104 = vmatprep.subr.mxu0 0.0
    %1105 = vmatpush1.msra.mxu0 0.0
    %1106 = vmatprep.subr.mxu0 0.0
    %1107 = vmatpush1.msra.mxu0 0.0
    %1108 = vmatprep.subr.mxu0 0.0
    %1109 = vmatpush1.msra.mxu0 %v991
    %1110 = vmatprep.subr.mxu0 0.0
    %1111 = vmatpush1.msra.mxu0 %v990
    %1112 = vmatprep.subr.mxu0 0.0
    %1113 = vmatpush2.msra.mxu0 0.0
    %1114 = vmatprep.subr.mxu0 0.0
    %1115 = vmatpush2.msra.mxu0 0.0
    %1116 = vmatprep.subr.mxu0 0.0
    %1117 = vmatpush2.msra.mxu0 0.0
    %1118 = vmatprep.subr.mxu0 0.0
    %1119 = vmatpush2.msra.mxu0 0.0
    %1120 = vmatprep.subr.mxu0 0.0
    %1121 = vmatpush2.msra.mxu0 0.0
    %1122 = vmatprep.subr.mxu0 0.0
    %1123 = vmatpush2.msra.mxu0 0.0
    %1124 = vmatprep.subr.mxu0 0.0
    %1125 = vmatpush2.msra.mxu0 0.0
    %1126 = vmatprep.subr.mxu0 0.0
    %1127 = vmatpush2.msra.mxu0 0.0
    %1128 = vmatprep.subr.mxu0 0.0
    %1129 = vmatpush2.msra.mxu0 0.0
    %1130 = vmatprep.subr.mxu0 0.0
    %1131 = vmatpush2.msra.mxu0 0.0
    %1132 = vmatprep.subr.mxu0 0.0
    %1133 = vmatpush2.msra.mxu0 0.0
    %1134 = vmatprep.subr.mxu0 0.0
    %1135 = vmatpush2.msra.mxu0 0.0
    %1136 = vmatprep.subr.mxu0 0.0
    %1137 = vmatpush2.msra.mxu0 0.0
    %1138 = vmatprep.subr.mxu0 0.0
    %1139 = vmatpush2.msra.mxu0 0.0
    %1140 = vmatprep.subr.mxu0 0.0
    %1141 = vmatpush2.msra.mxu0 0.0
    %1142 = vmatprep.subr.mxu0 0.0
    %1143 = vmatpush2.msra.mxu0 0.0
    %1144 = vmatprep.mubr.f32.mxu0 0.0
    %1145 = vmatmul.mubr.f32.gmra.mxu0 %v1075
    %v1146 = vpop.f32.mrf.mxu0
    %v1147 = vadd.f32 %v1066, %v1146
    %v1148 = vpop.f32.mrf.mxu0
    %1149 = vmatprep.mubr.f32.mxu0 0.0
    %1150 = vmatmul.mubr.f32.gmra.mxu0 %v1078
    %v1151 = vpop.f32.mrf.mxu0
    %v1152 = vadd.f32 %v1071, %v1151
    %v1153 = vpop.f32.mrf.mxu0
    %1154 = vdwg.mxu0
    %v1155 = vmul.f32 %v951, %v1147
    %v1156 = vmul.f32 %v952, %v1152
    %v1157 = vmul.f32 %v951, %v870
    %v1158 = vmul.f32 %v952, %v871
    %1159 = vxpose.xlu0.b32.start [1/16] %v1157, 128
    %1160 = vxpose.xlu0.b32.cont [2/16] %v1158, 128
    %1161 = vxpose.xlu0.b32.cont [3/16] 0.0, 128
    %1162 = vxpose.xlu0.b32.cont [4/16] 0.0, 128
    %1163 = vxpose.xlu0.b32.cont [5/16] 0.0, 128
    %1164 = vxpose.xlu0.b32.cont [6/16] 0.0, 128
    %1165 = vxpose.xlu0.b32.cont [7/16] 0.0, 128
    %1166 = vxpose.xlu0.b32.cont [8/16] 0.0, 128
    %1167 = vxpose.xlu0.b32.cont [9/16] 0.0, 128
    %1168 = vxpose.xlu0.b32.cont [10/16] 0.0, 128
    %1169 = vxpose.xlu0.b32.cont [11/16] 0.0, 128
    %1170 = vxpose.xlu0.b32.cont [12/16] 0.0, 128
    %1171 = vxpose.xlu0.b32.cont [13/16] 0.0, 128
    %1172 = vxpose.xlu0.b32.cont [14/16] 0.0, 128
    %1173 = vxpose.xlu0.b32.cont [15/16] 0.0, 128
    %1174 = vxpose.xlu0.b32.end [16/16] 0.0, 128
    %v1175 = vpop.trf.xlu0
    %v1176 = vpop.trf.xlu0
    %v1177 = vpop.trf.xlu0
    %v1178 = vpop.trf.xlu0
    %v1179 = vpop.trf.xlu0
    %v1180 = vpop.trf.xlu0
    %v1181 = vpop.trf.xlu0
    %v1182 = vpop.trf.xlu0
    %v1183 = vpop.trf.xlu0
    %v1184 = vpop.trf.xlu0
    %v1185 = vpop.trf.xlu0
    %v1186 = vpop.trf.xlu0
    %v1187 = vpop.trf.xlu0
    %v1188 = vpop.trf.xlu0
    %v1189 = vpop.trf.xlu0
    %v1190 = vpop.trf.xlu0
    %v1191 = vmul.f32 %v951, %v1175
    %v1192 = vmul.f32 %v952, %v1176
    %1193 = vst.msk [vmem:[#allocation28] sm:$0xff] %vm377, %v1191
    %1194 = vst.msk [vmem:[#allocation28 + $0x8] sm:$0xff] %vm377, %v1192
    %v1195 = vld [vmem:[%s35] sm:$0xff]
    %v1196 = vld [vmem:[%s35 + $0x8] sm:$0xff]
    %v1197 = vld [vmem:[%s37] sm:$0x1]
    %v1199 = vlaneseq
    %v1200 = vshrl.u32 %v1199, 7
    %v1201 = vsub.s32 0, %v1200
    %v1202 = vrot.slane %v1197, %v1201
    %v1205 = vsel %vm377, %v867, 0
    %1207 = vmatprep.subr.mxu0 0.0
    %1208 = vmatpush1.msra.mxu0 0.0
    %1209 = vmatprep.subr.mxu0 0.0
    %1210 = vmatpush1.msra.mxu0 0.0
    %1211 = vmatprep.subr.mxu0 0.0
    %1212 = vmatpush1.msra.mxu0 0.0
    %1213 = vmatprep.subr.mxu0 0.0
    %1214 = vmatpush1.msra.mxu0 0.0
    %1215 = vmatprep.subr.mxu0 0.0
    %1216 = vmatpush1.msra.mxu0 0.0
    %1217 = vmatprep.subr.mxu0 0.0
    %1218 = vmatpush1.msra.mxu0 0.0
    %1219 = vmatprep.subr.mxu0 0.0
    %1220 = vmatpush1.msra.mxu0 0.0
    %1221 = vmatprep.subr.mxu0 0.0
    %1222 = vmatpush1.msra.mxu0 0.0
    %1223 = vmatprep.subr.mxu0 0.0
    %1224 = vmatpush1.msra.mxu0 0.0
    %1225 = vmatprep.subr.mxu0 0.0
    %1226 = vmatpush1.msra.mxu0 0.0
    %1227 = vmatprep.subr.mxu0 0.0
    %1228 = vmatpush1.msra.mxu0 0.0
    %1229 = vmatprep.subr.mxu0 0.0
    %1230 = vmatpush1.msra.mxu0 0.0
    %1231 = vmatprep.subr.mxu0 0.0
    %1232 = vmatpush1.msra.mxu0 0.0
    %1233 = vmatprep.subr.mxu0 0.0
    %1234 = vmatpush1.msra.mxu0 0.0
    %1235 = vmatprep.subr.mxu0 0.0
    %1236 = vmatpush1.msra.mxu0 %v1196
    %1237 = vmatprep.subr.mxu0 0.0
    %1238 = vmatpush1.msra.mxu0 %v1195
    %1239 = vmatprep.subr.mxu0 0.0
    %1240 = vmatpush2.msra.mxu0 0.0
    %1241 = vmatprep.subr.mxu0 0.0
    %1242 = vmatpush2.msra.mxu0 0.0
    %1243 = vmatprep.subr.mxu0 0.0
    %1244 = vmatpush2.msra.mxu0 0.0
    %1245 = vmatprep.subr.mxu0 0.0
    %1246 = vmatpush2.msra.mxu0 0.0
    %1247 = vmatprep.subr.mxu0 0.0
    %1248 = vmatpush2.msra.mxu0 0.0
    %1249 = vmatprep.subr.mxu0 0.0
    %1250 = vmatpush2.msra.mxu0 0.0
    %1251 = vmatprep.subr.mxu0 0.0
    %1252 = vmatpush2.msra.mxu0 0.0
    %1253 = vmatprep.subr.mxu0 0.0
    %1254 = vmatpush2.msra.mxu0 0.0
    %1255 = vmatprep.subr.mxu0 0.0
    %1256 = vmatpush2.msra.mxu0 0.0
    %1257 = vmatprep.subr.mxu0 0.0
    %1258 = vmatpush2.msra.mxu0 0.0
    %1259 = vmatprep.subr.mxu0 0.0
    %1260 = vmatpush2.msra.mxu0 0.0
    %1261 = vmatprep.subr.mxu0 0.0
    %1262 = vmatpush2.msra.mxu0 0.0
    %1263 = vmatprep.subr.mxu0 0.0
    %1264 = vmatpush2.msra.mxu0 0.0
    %1265 = vmatprep.subr.mxu0 0.0
    %1266 = vmatpush2.msra.mxu0 0.0
    %1267 = vmatprep.subr.mxu0 0.0
    %1268 = vmatpush2.msra.mxu0 0.0
    %1269 = vmatprep.subr.mxu0 0.0
    %1270 = vmatpush2.msra.mxu0 0.0
    %1271 = vmatprep.mubr.f32.mxu0 0.0
    %1272 = vmatmul.mubr.f32.gmra.mxu0 %v1205
    %v1273 = vpop.f32.mrf.mxu0
    %v1274 = vadd.f32 %v1202, %v1273
    %v1275 = vpop.f32.mrf.mxu0
    %1276 = vdwg.mxu0
    %v1278 = vsel %vm377, %v1155, 0
    %v1281 = vsel %vm377, %v1156, 0
    %1283 = vmatprep.subr.mxu0 0.0
    %1284 = vmatpush1.msra.mxu0 0.0
    %1285 = vmatprep.subr.mxu0 0.0
    %1286 = vmatpush1.msra.mxu0 0.0
    %1287 = vmatprep.subr.mxu0 0.0
    %1288 = vmatpush1.msra.mxu0 0.0
    %1289 = vmatprep.subr.mxu0 0.0
    %1290 = vmatpush1.msra.mxu0 0.0
    %1291 = vmatprep.subr.mxu0 0.0
    %1292 = vmatpush1.msra.mxu0 0.0
    %1293 = vmatprep.subr.mxu0 0.0
    %1294 = vmatpush1.msra.mxu0 0.0
    %1295 = vmatprep.subr.mxu0 0.0
    %1296 = vmatpush1.msra.mxu0 0.0
    %1297 = vmatprep.subr.mxu0 0.0
    %1298 = vmatpush1.msra.mxu0 0.0
    %1299 = vmatprep.subr.mxu0 0.0
    %1300 = vmatpush1.msra.mxu0 0.0
    %1301 = vmatprep.subr.mxu0 0.0
    %1302 = vmatpush1.msra.mxu0 0.0
    %1303 = vmatprep.subr.mxu0 0.0
    %1304 = vmatpush1.msra.mxu0 0.0
    %1305 = vmatprep.subr.mxu0 0.0
    %1306 = vmatpush1.msra.mxu0 0.0
    %1307 = vmatprep.subr.mxu0 0.0
    %1308 = vmatpush1.msra.mxu0 0.0
    %1309 = vmatprep.subr.mxu0 0.0
    %1310 = vmatpush1.msra.mxu0 0.0
    %1311 = vmatprep.subr.mxu0 0.0
    %1312 = vmatpush1.msra.mxu0 %v1196
    %1313 = vmatprep.subr.mxu0 0.0
    %1314 = vmatpush1.msra.mxu0 %v1195
    %1315 = vmatprep.subr.mxu0 0.0
    %1316 = vmatpush2.msra.mxu0 0.0
    %1317 = vmatprep.subr.mxu0 0.0
    %1318 = vmatpush2.msra.mxu0 0.0
    %1319 = vmatprep.subr.mxu0 0.0
    %1320 = vmatpush2.msra.mxu0 0.0
    %1321 = vmatprep.subr.mxu0 0.0
    %1322 = vmatpush2.msra.mxu0 0.0
    %1323 = vmatprep.subr.mxu0 0.0
    %1324 = vmatpush2.msra.mxu0 0.0
    %1325 = vmatprep.subr.mxu0 0.0
    %1326 = vmatpush2.msra.mxu0 0.0
    %1327 = vmatprep.subr.mxu0 0.0
    %1328 = vmatpush2.msra.mxu0 0.0
    %1329 = vmatprep.subr.mxu0 0.0
    %1330 = vmatpush2.msra.mxu0 0.0
    %1331 = vmatprep.subr.mxu0 0.0
    %1332 = vmatpush2.msra.mxu0 0.0
    %1333 = vmatprep.subr.mxu0 0.0
    %1334 = vmatpush2.msra.mxu0 0.0
    %1335 = vmatprep.subr.mxu0 0.0
    %1336 = vmatpush2.msra.mxu0 0.0
    %1337 = vmatprep.subr.mxu0 0.0
    %1338 = vmatpush2.msra.mxu0 0.0
    %1339 = vmatprep.subr.mxu0 0.0
    %1340 = vmatpush2.msra.mxu0 0.0
    %1341 = vmatprep.subr.mxu0 0.0
    %1342 = vmatpush2.msra.mxu0 0.0
    %1343 = vmatprep.subr.mxu0 0.0
    %1344 = vmatpush2.msra.mxu0 0.0
    %1345 = vmatprep.subr.mxu0 0.0
    %1346 = vmatpush2.msra.mxu0 0.0
    %1347 = vmatprep.mubr.f32.mxu0 0.0
    %1348 = vmatmul.mubr.f32.gmra.mxu0 %v1278
    %v1349 = vpop.f32.mrf.mxu0
    %v1350 = vadd.f32 %v1202, %v1349
    %v1351 = vpop.f32.mrf.mxu0
    %1352 = vmatprep.mubr.f32.mxu0 0.0
    %1353 = vmatmul.mubr.f32.gmra.mxu0 %v1281
    %v1354 = vpop.f32.mrf.mxu0
    %v1355 = vadd.f32 %v1202, %v1354
    %v1356 = vpop.f32.mrf.mxu0
    %1357 = vdwg.mxu0
    %1358 = vst.msk [vmem:[#allocation25] sm:$0xff] %vm268, %v1274
    %1359 = vst.msk [vmem:[#allocation26] sm:$0xff] %vm268, %v1350
    %1360 = vst.msk [vmem:[#allocation26 + $0x8] sm:$0xff] %vm268, %v1355
    %v1361 = vmul.f32 %v375, %v375
    %v1362 = vmul.f32 %v481, %v481
    %v1363 = vsel %vm268, %v1361, 0.0
    %1364 = vadd.xlane.f32.xlu0 %v1363
    %v1365 = vpop.xlane.xlu0 %1364
    %v1366 = vsel %vm268, %v1362, 0.0
    %1367 = vadd.xlane.f32.xlu0 %v1366
    %v1368 = vpop.xlane.xlu0 %1367
    %v1369 = vrsqrt.pop %v1365
    %v1370 = vmul.f32 %v1365, %v1369
    %vm1371 = vcmp.eq.f32.partialorder %v1365, inf
    %v1372 = vsel %vm1371, %v1365, %v1370
    %vm1373 = vcmp.eq.f32.partialorder %v1365, 0.0
    %v1374 = vand.u32 %v1365, 2147483648
    %v1375 = vsel %vm1373, %v1374, %v1372
    %v1376 = vrsqrt.pop %v1368
    %v1377 = vmul.f32 %v1368, %v1376
    %vm1378 = vcmp.eq.f32.partialorder %v1368, inf
    %v1379 = vsel %vm1378, %v1368, %v1377
    %vm1380 = vcmp.eq.f32.partialorder %v1368, 0.0
    %v1381 = vand.u32 %v1368, 2147483648
    %v1382 = vsel %vm1380, %v1381, %v1379
    %1383 = vxpose.xlu0.b32.start [1/16] %v1274, 128
    %1384 = vxpose.xlu0.b32.cont [2/16] 0.0, 128
    %1385 = vxpose.xlu0.b32.cont [3/16] 0.0, 128
    %1386 = vxpose.xlu0.b32.cont [4/16] 0.0, 128
    %1387 = vxpose.xlu0.b32.cont [5/16] 0.0, 128
    %1388 = vxpose.xlu0.b32.cont [6/16] 0.0, 128
    %1389 = vxpose.xlu0.b32.cont [7/16] 0.0, 128
    %1390 = vxpose.xlu0.b32.cont [8/16] 0.0, 128
    %1391 = vxpose.xlu0.b32.cont [9/16] 0.0, 128
    %1392 = vxpose.xlu0.b32.cont [10/16] 0.0, 128
    %1393 = vxpose.xlu0.b32.cont [11/16] 0.0, 128
    %1394 = vxpose.xlu0.b32.cont [12/16] 0.0, 128
    %1395 = vxpose.xlu0.b32.cont [13/16] 0.0, 128
    %1396 = vxpose.xlu0.b32.cont [14/16] 0.0, 128
    %1397 = vxpose.xlu0.b32.cont [15/16] 0.0, 128
    %1398 = vxpose.xlu0.b32.end [16/16] 0.0, 128
    %v1399 = vpop.trf.xlu0
    %v1400 = vpop.trf.xlu0
    %v1401 = vpop.trf.xlu0
    %v1402 = vpop.trf.xlu0
    %v1403 = vpop.trf.xlu0
    %v1404 = vpop.trf.xlu0
    %v1405 = vpop.trf.xlu0
    %v1406 = vpop.trf.xlu0
    %v1407 = vpop.trf.xlu0
    %v1408 = vpop.trf.xlu0
    %v1409 = vpop.trf.xlu0
    %v1410 = vpop.trf.xlu0
    %v1411 = vpop.trf.xlu0
    %v1412 = vpop.trf.xlu0
    %v1413 = vpop.trf.xlu0
    %v1414 = vpop.trf.xlu0
    %v1415 = vmul.f32 %v1399, %v1399
    %v1416 = vmul.f32 %v1400, %v1400
    %v1417 = vmul.f32 %v1401, %v1401
    %v1418 = vmul.f32 %v1402, %v1402
    %v1419 = vsel %vm505, %v1415, 0.0
    %v1420 = vsel %vm505, %v1416, 0.0
    %v1421 = vadd.f32 %v1419, %v1420
    %v1422 = vsel %vm505, %v1417, 0.0
    %v1423 = vadd.f32 %v1421, %v1422
    %v1424 = vsel %vm505, %v1418, 0.0
    %v1425 = vadd.f32 %v1423, %v1424
    %v1426 = vrot.slane %v1425, 4
    %v1427 = vadd.f32 %v1425, %v1426
    %v1428 = vrot.slane %v1427, 2
    %v1429 = vadd.f32 %v1427, %v1428
    %v1430 = vrot.slane %v1429, 1
    %v1431 = vadd.f32 %v1429, %v1430
    %v1432 = vrsqrt.pop %v1431
    %v1433 = vmul.f32 %v1431, %v1432
    %vm1434 = vcmp.eq.f32.partialorder %v1431, inf
    %v1435 = vsel %vm1434, %v1431, %v1433
    %vm1436 = vcmp.eq.f32.partialorder %v1431, 0.0
    %v1437 = vand.u32 %v1431, 2147483648
    %v1438 = vsel %vm1436, %v1437, %v1435
    %v1440 = vsel %vm268, %v375, 0
    %v1443 = vsel %vm268, %v481, 0
    %1445 = vmatprep.subr.mxu0 0.0
    %1446 = vmatpush1.msra.mxu0 0.0
    %1447 = vmatprep.subr.mxu0 0.0
    %1448 = vmatpush1.msra.mxu0 0.0
    %1449 = vmatprep.subr.mxu0 0.0
    %1450 = vmatpush1.msra.mxu0 0.0
    %1451 = vmatprep.subr.mxu0 0.0
    %1452 = vmatpush1.msra.mxu0 0.0
    %1453 = vmatprep.subr.mxu0 0.0
    %1454 = vmatpush1.msra.mxu0 0.0
    %1455 = vmatprep.subr.mxu0 0.0
    %1456 = vmatpush1.msra.mxu0 0.0
    %1457 = vmatprep.subr.mxu0 0.0
    %1458 = vmatpush1.msra.mxu0 0.0
    %1459 = vmatprep.subr.mxu0 0.0
    %1460 = vmatpush1.msra.mxu0 0.0
    %1461 = vmatprep.subr.mxu0 0.0
    %1462 = vmatpush1.msra.mxu0 0.0
    %1463 = vmatprep.subr.mxu0 0.0
    %1464 = vmatpush1.msra.mxu0 0.0
    %1465 = vmatprep.subr.mxu0 0.0
    %1466 = vmatpush1.msra.mxu0 0.0
    %1467 = vmatprep.subr.mxu0 0.0
    %1468 = vmatpush1.msra.mxu0 0.0
    %1469 = vmatprep.subr.mxu0 0.0
    %1470 = vmatpush1.msra.mxu0 %v1402
    %1471 = vmatprep.subr.mxu0 0.0
    %1472 = vmatpush1.msra.mxu0 %v1401
    %1473 = vmatprep.subr.mxu0 0.0
    %1474 = vmatpush1.msra.mxu0 %v1400
    %1475 = vmatprep.subr.mxu0 0.0
    %1476 = vmatpush1.msra.mxu0 %v1399
    %1477 = vmatprep.subr.mxu0 0.0
    %1478 = vmatpush2.msra.mxu0 0.0
    %1479 = vmatprep.subr.mxu0 0.0
    %1480 = vmatpush2.msra.mxu0 0.0
    %1481 = vmatprep.subr.mxu0 0.0
    %1482 = vmatpush2.msra.mxu0 0.0
    %1483 = vmatprep.subr.mxu0 0.0
    %1484 = vmatpush2.msra.mxu0 0.0
    %1485 = vmatprep.subr.mxu0 0.0
    %1486 = vmatpush2.msra.mxu0 0.0
    %1487 = vmatprep.subr.mxu0 0.0
    %1488 = vmatpush2.msra.mxu0 0.0
    %1489 = vmatprep.subr.mxu0 0.0
    %1490 = vmatpush2.msra.mxu0 0.0
    %1491 = vmatprep.subr.mxu0 0.0
    %1492 = vmatpush2.msra.mxu0 0.0
    %1493 = vmatprep.subr.mxu0 0.0
    %1494 = vmatpush2.msra.mxu0 0.0
    %1495 = vmatprep.subr.mxu0 0.0
    %1496 = vmatpush2.msra.mxu0 0.0
    %1497 = vmatprep.subr.mxu0 0.0
    %1498 = vmatpush2.msra.mxu0 0.0
    %1499 = vmatprep.subr.mxu0 0.0
    %1500 = vmatpush2.msra.mxu0 0.0
    %1501 = vmatprep.subr.mxu0 0.0
    %1502 = vmatpush2.msra.mxu0 0.0
    %1503 = vmatprep.subr.mxu0 0.0
    %1504 = vmatpush2.msra.mxu0 0.0
    %1505 = vmatprep.subr.mxu0 0.0
    %1506 = vmatpush2.msra.mxu0 0.0
    %1507 = vmatprep.subr.mxu0 0.0
    %1508 = vmatpush2.msra.mxu0 0.0
    %1509 = vmatprep.mubr.f32.mxu0 0.0
    %1510 = vmatmul.mubr.f32.gmra.mxu0 %v1440
    %v1511 = vpop.f32.mrf.mxu0
    %v1512 = vadd.f32 0.0, %v1511
    %v1513 = vpop.f32.mrf.mxu0
    %1514 = vmatprep.mubr.f32.mxu0 0.0
    %1515 = vmatmul.mubr.f32.gmra.mxu0 %v1443
    %v1516 = vpop.f32.mrf.mxu0
    %v1517 = vadd.f32 0.0, %v1516
    %v1518 = vpop.f32.mrf.mxu0
    %1519 = vdwg.mxu0
    %v1520 = vmul.f32 %v1375, %v1438
    %v1521 = vmul.f32 %v1382, %v1438
    %v1522 = vadd.f32 %v1520, 1e-06
    %v1523 = vadd.f32 %v1521, 1e-06
    %v1524 = vrcp.pop %v1522
    %v1525 = vrcp.pop %v1523
    %v1526 = vmul.f32 %v1512, %v1524
    %v1527 = vmul.f32 %v1517, %v1525
    %1528 = vst.msk [vmem:[#allocation22] sm:$0xff] %vm505, %v1526
    %1529 = vst.msk [vmem:[#allocation23] sm:$0xff] %vm505, %v1527
    %v1530 = vld [vmem:[%s39] sm:$0xff]
    %v1531 = vld [vmem:[%s39 + $0x8] sm:$0xff]
    %v1532 = vld [vmem:[%s39 + $0x10] sm:$0xff]
    %v1533 = vld [vmem:[%s39 + $0x18] sm:$0xff]
    %v1534 = vld [vmem:[%s41] sm:$0x1]
    %v1535 = vld [vmem:[%s43] sm:$0xff]
    %v1536 = vld [vmem:[%s45] sm:$0x1]
    %v1537 = vld [vmem:[%s47] sm:$0x3]
    %v1538 = vld [vmem:[%s49] sm:$0x1]
    %v1539 = vsel %vm268, %v1274, 0.0
    %v1540 = vrot.slane %v1539, 4
    %v1541 = vadd.f32 %v1539, %v1540
    %v1542 = vrot.slane %v1541, 2
    %v1543 = vadd.f32 %v1541, %v1542
    %v1544 = vrot.slane %v1543, 1
    %v1545 = vadd.f32 %v1543, %v1544
    %v1546 = vmul.f32 %v1545, %v276
    %v1547 = vsub.f32 %v1274, %v1546
    %v1548 = vmul.f32 %v1547, %v1547
    %v1549 = vsel %vm268, %v1548, 0.0
    %v1550 = vrot.slane %v1549, 4
    %v1551 = vadd.f32 %v1549, %v1550
    %v1552 = vrot.slane %v1551, 2
    %v1553 = vadd.f32 %v1551, %v1552
    %v1554 = vrot.slane %v1553, 1
    %v1555 = vadd.f32 %v1553, %v1554
    %v1556 = vmul.f32 %v1555, %v276
    %v1557 = vadd.f32 %v1556, 1e-05
    %v1558 = vrsqrt.pop %v1557
    %v1559 = vmul.f32 %v1547, %v1558
    %v1561 = vlaneseq
    %v1562 = vshrl.u32 %v1561, 7
    %v1563 = vsub.s32 0, %v1562
    %v1564 = vrot.slane %v1534, %v1563
    %v1567 = vsel %vm268, %v1559, 0
    %1569 = vmatprep.subr.mxu0 0.0
    %1570 = vmatpush1.msra.mxu0 0.0
    %1571 = vmatprep.subr.mxu0 0.0
    %1572 = vmatpush1.msra.mxu0 0.0
    %1573 = vmatprep.subr.mxu0 0.0
    %1574 = vmatpush1.msra.mxu0 0.0
    %1575 = vmatprep.subr.mxu0 0.0
    %1576 = vmatpush1.msra.mxu0 0.0
    %1577 = vmatprep.subr.mxu0 0.0
    %1578 = vmatpush1.msra.mxu0 0.0
    %1579 = vmatprep.subr.mxu0 0.0
    %1580 = vmatpush1.msra.mxu0 0.0
    %1581 = vmatprep.subr.mxu0 0.0
    %1582 = vmatpush1.msra.mxu0 0.0
    %1583 = vmatprep.subr.mxu0 0.0
    %1584 = vmatpush1.msra.mxu0 0.0
    %1585 = vmatprep.subr.mxu0 0.0
    %1586 = vmatpush1.msra.mxu0 0.0
    %1587 = vmatprep.subr.mxu0 0.0
    %1588 = vmatpush1.msra.mxu0 0.0
    %1589 = vmatprep.subr.mxu0 0.0
    %1590 = vmatpush1.msra.mxu0 0.0
    %1591 = vmatprep.subr.mxu0 0.0
    %1592 = vmatpush1.msra.mxu0 0.0
    %1593 = vmatprep.subr.mxu0 0.0
    %1594 = vmatpush1.msra.mxu0 %v1533
    %1595 = vmatprep.subr.mxu0 0.0
    %1596 = vmatpush1.msra.mxu0 %v1532
    %1597 = vmatprep.subr.mxu0 0.0
    %1598 = vmatpush1.msra.mxu0 %v1531
    %1599 = vmatprep.subr.mxu0 0.0
    %1600 = vmatpush1.msra.mxu0 %v1530
    %1601 = vmatprep.subr.mxu0 0.0
    %1602 = vmatpush2.msra.mxu0 0.0
    %1603 = vmatprep.subr.mxu0 0.0
    %1604 = vmatpush2.msra.mxu0 0.0
    %1605 = vmatprep.subr.mxu0 0.0
    %1606 = vmatpush2.msra.mxu0 0.0
    %1607 = vmatprep.subr.mxu0 0.0
    %1608 = vmatpush2.msra.mxu0 0.0
    %1609 = vmatprep.subr.mxu0 0.0
    %1610 = vmatpush2.msra.mxu0 0.0
    %1611 = vmatprep.subr.mxu0 0.0
    %1612 = vmatpush2.msra.mxu0 0.0
    %1613 = vmatprep.subr.mxu0 0.0
    %1614 = vmatpush2.msra.mxu0 0.0
    %1615 = vmatprep.subr.mxu0 0.0
    %1616 = vmatpush2.msra.mxu0 0.0
    %1617 = vmatprep.subr.mxu0 0.0
    %1618 = vmatpush2.msra.mxu0 0.0
    %1619 = vmatprep.subr.mxu0 0.0
    %1620 = vmatpush2.msra.mxu0 0.0
    %1621 = vmatprep.subr.mxu0 0.0
    %1622 = vmatpush2.msra.mxu0 0.0
    %1623 = vmatprep.subr.mxu0 0.0
    %1624 = vmatpush2.msra.mxu0 0.0
    %1625 = vmatprep.subr.mxu0 0.0
    %1626 = vmatpush2.msra.mxu0 0.0
    %1627 = vmatprep.subr.mxu0 0.0
    %1628 = vmatpush2.msra.mxu0 0.0
    %1629 = vmatprep.subr.mxu0 0.0
    %1630 = vmatpush2.msra.mxu0 0.0
    %1631 = vmatprep.subr.mxu0 0.0
    %1632 = vmatpush2.msra.mxu0 0.0
    %1633 = vmatprep.mubr.f32.mxu0 0.0
    %1634 = vmatmul.mubr.f32.gmra.mxu0 %v1567
    %v1635 = vpop.f32.mrf.mxu0
    %v1636 = vadd.f32 %v1564, %v1635
    %v1637 = vpop.f32.mrf.mxu0
    %1638 = vdwg.mxu0
    %v1639 = vmax.f32 %v1636, 0.0
    %v1641 = vlaneseq
    %v1642 = vshrl.u32 %v1641, 7
    %v1643 = vsub.s32 0, %v1642
    %v1644 = vrot.slane %v1536, %v1643
    %v1647 = vsel %vm505, %v1639, 0
    %1649 = vmatprep.subr.mxu0 0.0
    %1650 = vmatpush1.msra.mxu0 0.0
    %1651 = vmatprep.subr.mxu0 0.0
    %1652 = vmatpush1.msra.mxu0 0.0
    %1653 = vmatprep.subr.mxu0 0.0
    %1654 = vmatpush1.msra.mxu0 0.0
    %1655 = vmatprep.subr.mxu0 0.0
    %1656 = vmatpush1.msra.mxu0 0.0
    %1657 = vmatprep.subr.mxu0 0.0
    %1658 = vmatpush1.msra.mxu0 0.0
    %1659 = vmatprep.subr.mxu0 0.0
    %1660 = vmatpush1.msra.mxu0 0.0
    %1661 = vmatprep.subr.mxu0 0.0
    %1662 = vmatpush1.msra.mxu0 0.0
    %1663 = vmatprep.subr.mxu0 0.0
    %1664 = vmatpush1.msra.mxu0 0.0
    %1665 = vmatprep.subr.mxu0 0.0
    %1666 = vmatpush1.msra.mxu0 0.0
    %1667 = vmatprep.subr.mxu0 0.0
    %1668 = vmatpush1.msra.mxu0 0.0
    %1669 = vmatprep.subr.mxu0 0.0
    %1670 = vmatpush1.msra.mxu0 0.0
    %1671 = vmatprep.subr.mxu0 0.0
    %1672 = vmatpush1.msra.mxu0 0.0
    %1673 = vmatprep.subr.mxu0 0.0
    %1674 = vmatpush1.msra.mxu0 0.0
    %1675 = vmatprep.subr.mxu0 0.0
    %1676 = vmatpush1.msra.mxu0 0.0
    %1677 = vmatprep.subr.mxu0 0.0
    %1678 = vmatpush1.msra.mxu0 0.0
    %1679 = vmatprep.subr.mxu0 0.0
    %1680 = vmatpush1.msra.mxu0 %v1535
    %1681 = vmatprep.subr.mxu0 0.0
    %1682 = vmatpush2.msra.mxu0 0.0
    %1683 = vmatprep.subr.mxu0 0.0
    %1684 = vmatpush2.msra.mxu0 0.0
    %1685 = vmatprep.subr.mxu0 0.0
    %1686 = vmatpush2.msra.mxu0 0.0
    %1687 = vmatprep.subr.mxu0 0.0
    %1688 = vmatpush2.msra.mxu0 0.0
    %1689 = vmatprep.subr.mxu0 0.0
    %1690 = vmatpush2.msra.mxu0 0.0
    %1691 = vmatprep.subr.mxu0 0.0
    %1692 = vmatpush2.msra.mxu0 0.0
    %1693 = vmatprep.subr.mxu0 0.0
    %1694 = vmatpush2.msra.mxu0 0.0
    %1695 = vmatprep.subr.mxu0 0.0
    %1696 = vmatpush2.msra.mxu0 0.0
    %1697 = vmatprep.subr.mxu0 0.0
    %1698 = vmatpush2.msra.mxu0 0.0
    %1699 = vmatprep.subr.mxu0 0.0
    %1700 = vmatpush2.msra.mxu0 0.0
    %1701 = vmatprep.subr.mxu0 0.0
    %1702 = vmatpush2.msra.mxu0 0.0
    %1703 = vmatprep.subr.mxu0 0.0
    %1704 = vmatpush2.msra.mxu0 0.0
    %1705 = vmatprep.subr.mxu0 0.0
    %1706 = vmatpush2.msra.mxu0 0.0
    %1707 = vmatprep.subr.mxu0 0.0
    %1708 = vmatpush2.msra.mxu0 0.0
    %1709 = vmatprep.subr.mxu0 0.0
    %1710 = vmatpush2.msra.mxu0 0.0
    %1711 = vmatprep.subr.mxu0 0.0
    %1712 = vmatpush2.msra.mxu0 0.0
    %1713 = vmatprep.mubr.f32.mxu0 0.0
    %1714 = vmatmul.mubr.f32.gmra.mxu0 %v1647
    %v1715 = vpop.f32.mrf.mxu0
    %v1716 = vadd.f32 %v1644, %v1715
    %v1717 = vpop.f32.mrf.mxu0
    %1718 = vdwg.mxu0
    %v1719 = vmax.f32 %v1716, 0.0
    %v1721 = vlaneseq
    %v1722 = vshrl.u32 %v1721, 7
    %v1723 = vsub.s32 0, %v1722
    %v1724 = vrot.slane %v1538, %v1723
    %vm1726 = vcmask 15360
    %v1728 = vsel %vm1726, %v1719, 0
    %vm1730 = vcmask 1041408
    %v1732 = vsel %vm1730, %v1537, 0
    %1734 = vmatprep.subr.mxu0 0.0
    %1735 = vmatpush1.msra.mxu0 0.0
    %1736 = vmatprep.subr.mxu0 0.0
    %1737 = vmatpush1.msra.mxu0 0.0
    %1738 = vmatprep.subr.mxu0 0.0
    %1739 = vmatpush1.msra.mxu0 0.0
    %1740 = vmatprep.subr.mxu0 0.0
    %1741 = vmatpush1.msra.mxu0 0.0
    %1742 = vmatprep.subr.mxu0 0.0
    %1743 = vmatpush1.msra.mxu0 0.0
    %1744 = vmatprep.subr.mxu0 0.0
    %1745 = vmatpush1.msra.mxu0 0.0
    %1746 = vmatprep.subr.mxu0 0.0
    %1747 = vmatpush1.msra.mxu0 0.0
    %1748 = vmatprep.subr.mxu0 0.0
    %1749 = vmatpush1.msra.mxu0 0.0
    %1750 = vmatprep.subr.mxu0 0.0
    %1751 = vmatpush1.msra.mxu0 0.0
    %1752 = vmatprep.subr.mxu0 0.0
    %1753 = vmatpush1.msra.mxu0 0.0
    %1754 = vmatprep.subr.mxu0 0.0
    %1755 = vmatpush1.msra.mxu0 0.0
    %1756 = vmatprep.subr.mxu0 0.0
    %1757 = vmatpush1.msra.mxu0 0.0
    %1758 = vmatprep.subr.mxu0 0.0
    %1759 = vmatpush1.msra.mxu0 0.0
    %1760 = vmatprep.subr.mxu0 0.0
    %1761 = vmatpush1.msra.mxu0 0.0
    %1762 = vmatprep.subr.mxu0 0.0
    %1763 = vmatpush1.msra.mxu0 0.0
    %1764 = vmatprep.subr.mxu0 0.0
    %1765 = vmatpush1.msra.mxu0 %v1732
    %1766 = vmatprep.subr.mxu0 0.0
    %1767 = vmatpush2.msra.mxu0 0.0
    %1768 = vmatprep.subr.mxu0 0.0
    %1769 = vmatpush2.msra.mxu0 0.0
    %1770 = vmatprep.subr.mxu0 0.0
    %1771 = vmatpush2.msra.mxu0 0.0
    %1772 = vmatprep.subr.mxu0 0.0
    %1773 = vmatpush2.msra.mxu0 0.0
    %1774 = vmatprep.subr.mxu0 0.0
    %1775 = vmatpush2.msra.mxu0 0.0
    %1776 = vmatprep.subr.mxu0 0.0
    %1777 = vmatpush2.msra.mxu0 0.0
    %1778 = vmatprep.subr.mxu0 0.0
    %1779 = vmatpush2.msra.mxu0 0.0
    %1780 = vmatprep.subr.mxu0 0.0
    %1781 = vmatpush2.msra.mxu0 0.0
    %1782 = vmatprep.subr.mxu0 0.0
    %1783 = vmatpush2.msra.mxu0 0.0
    %1784 = vmatprep.subr.mxu0 0.0
    %1785 = vmatpush2.msra.mxu0 0.0
    %1786 = vmatprep.subr.mxu0 0.0
    %1787 = vmatpush2.msra.mxu0 0.0
    %1788 = vmatprep.subr.mxu0 0.0
    %1789 = vmatpush2.msra.mxu0 0.0
    %1790 = vmatprep.subr.mxu0 0.0
    %1791 = vmatpush2.msra.mxu0 0.0
    %1792 = vmatprep.subr.mxu0 0.0
    %1793 = vmatpush2.msra.mxu0 0.0
    %1794 = vmatprep.subr.mxu0 0.0
    %1795 = vmatpush2.msra.mxu0 0.0
    %1796 = vmatprep.subr.mxu0 0.0
    %1797 = vmatpush2.msra.mxu0 0.0
    %1798 = vmatprep.mubr.f32.mxu0 0.0
    %1799 = vmatmul.mubr.f32.gmra.mxu0 %v1728
    %v1800 = vpop.f32.mrf.mxu0
    %v1801 = vadd.f32 %v1724, %v1800
    %v1802 = vpop.f32.mrf.mxu0
    %1803 = vdwg.mxu0
    %v1804 = vsel %vm1726, %v1801, -inf
    %1805 = vmax.xlane.f32.xlu0 %v1804
    %v1806 = vpop.xlane.xlu0 %1805
    %v1807 = vsub.f32 %v1801, %v1806
    %v1808 = vmul.f32 %v1807, 1.442695
    %v1809 = vpow.pop %v1808
    %v1810 = vsel %vm1726, %v1809, 0.0
    %1811 = vadd.xlane.f32.xlu0 %v1810
    %v1812 = vpop.xlane.xlu0 %1811
    %v1813 = vrcp.pop %v1812
    %v1814 = vmul.f32 %v1809, %v1813
    %1815 = vst.msk [vmem:[%s75] sm:$0xff] %vm1726, %v1814
    %v1816 = vld [vmem:[%s51] sm:$0xff]
    %v1817 = vld [vmem:[%s51 + $0x8] sm:$0xff]
    %v1818 = vld [vmem:[%s51 + $0x10] sm:$0xff]
    %v1819 = vld [vmem:[%s51 + $0x18] sm:$0xff]
    %v1820 = vld [vmem:[%s53] sm:$0x1]
    %v1821 = vld [vmem:[%s55] sm:$0xff]
    %v1822 = vld [vmem:[%s57] sm:$0x1]
    %v1823 = vld [vmem:[%s59] sm:$0x3]
    %v1824 = vld [vmem:[%s61] sm:$0x1]
    %v1825 = vsel %vm268, %v1350, 0.0
    %v1826 = vsel %vm268, %v1355, 0.0
    %v1827 = vadd.f32 %v1825, %v1826
    %v1828 = vrot.slane %v1827, 4
    %v1829 = vadd.f32 %v1827, %v1828
    %v1830 = vrot.slane %v1829, 2
    %v1831 = vadd.f32 %v1829, %v1830
    %v1832 = vrot.slane %v1831, 1
    %v1833 = vadd.f32 %v1831, %v1832
    %v1834 = vrcp.pop 16.0
    %v1835 = vmul.f32 %v1833, %v1834
    %v1836 = vsub.f32 %v1350, %v1835
    %v1837 = vsub.f32 %v1355, %v1835
    %v1838 = vmul.f32 %v1836, %v1836
    %v1839 = vmul.f32 %v1837, %v1837
    %v1840 = vsel %vm268, %v1838, 0.0
    %v1841 = vsel %vm268, %v1839, 0.0
    %v1842 = vadd.f32 %v1840, %v1841
    %v1843 = vrot.slane %v1842, 4
    %v1844 = vadd.f32 %v1842, %v1843
    %v1845 = vrot.slane %v1844, 2
    %v1846 = vadd.f32 %v1844, %v1845
    %v1847 = vrot.slane %v1846, 1
    %v1848 = vadd.f32 %v1846, %v1847
    %v1849 = vmul.f32 %v1848, %v1834
    %v1850 = vadd.f32 %v1849, 1e-05
    %v1851 = vrsqrt.pop %v1850
    %v1852 = vmul.f32 %v1836, %v1851
    %v1853 = vmul.f32 %v1837, %v1851
    %v1855 = vlaneseq
    %v1856 = vshrl.u32 %v1855, 7
    %v1857 = vsub.s32 0, %v1856
    %v1858 = vrot.slane %v1820, %v1857
    %v1861 = vsel %vm268, %v1852, 0
    %v1864 = vsel %vm268, %v1853, 0
    %1866 = vmatprep.subr.mxu0 0.0
    %1867 = vmatpush1.msra.mxu0 0.0
    %1868 = vmatprep.subr.mxu0 0.0
    %1869 = vmatpush1.msra.mxu0 0.0
    %1870 = vmatprep.subr.mxu0 0.0
    %1871 = vmatpush1.msra.mxu0 0.0
    %1872 = vmatprep.subr.mxu0 0.0
    %1873 = vmatpush1.msra.mxu0 0.0
    %1874 = vmatprep.subr.mxu0 0.0
    %1875 = vmatpush1.msra.mxu0 0.0
    %1876 = vmatprep.subr.mxu0 0.0
    %1877 = vmatpush1.msra.mxu0 0.0
    %1878 = vmatprep.subr.mxu0 0.0
    %1879 = vmatpush1.msra.mxu0 0.0
    %1880 = vmatprep.subr.mxu0 0.0
    %1881 = vmatpush1.msra.mxu0 0.0
    %1882 = vmatprep.subr.mxu0 0.0
    %1883 = vmatpush1.msra.mxu0 0.0
    %1884 = vmatprep.subr.mxu0 0.0
    %1885 = vmatpush1.msra.mxu0 0.0
    %1886 = vmatprep.subr.mxu0 0.0
    %1887 = vmatpush1.msra.mxu0 0.0
    %1888 = vmatprep.subr.mxu0 0.0
    %1889 = vmatpush1.msra.mxu0 0.0
    %1890 = vmatprep.subr.mxu0 0.0
    %1891 = vmatpush1.msra.mxu0 %v1819
    %1892 = vmatprep.subr.mxu0 0.0
    %1893 = vmatpush1.msra.mxu0 %v1818
    %1894 = vmatprep.subr.mxu0 0.0
    %1895 = vmatpush1.msra.mxu0 %v1817
    %1896 = vmatprep.subr.mxu0 0.0
    %1897 = vmatpush1.msra.mxu0 %v1816
    %1898 = vmatprep.subr.mxu0 0.0
    %1899 = vmatpush2.msra.mxu0 0.0
    %1900 = vmatprep.subr.mxu0 0.0
    %1901 = vmatpush2.msra.mxu0 0.0
    %1902 = vmatprep.subr.mxu0 0.0
    %1903 = vmatpush2.msra.mxu0 0.0
    %1904 = vmatprep.subr.mxu0 0.0
    %1905 = vmatpush2.msra.mxu0 0.0
    %1906 = vmatprep.subr.mxu0 0.0
    %1907 = vmatpush2.msra.mxu0 0.0
    %1908 = vmatprep.subr.mxu0 0.0
    %1909 = vmatpush2.msra.mxu0 0.0
    %1910 = vmatprep.subr.mxu0 0.0
    %1911 = vmatpush2.msra.mxu0 0.0
    %1912 = vmatprep.subr.mxu0 0.0
    %1913 = vmatpush2.msra.mxu0 0.0
    %1914 = vmatprep.subr.mxu0 0.0
    %1915 = vmatpush2.msra.mxu0 0.0
    %1916 = vmatprep.subr.mxu0 0.0
    %1917 = vmatpush2.msra.mxu0 0.0
    %1918 = vmatprep.subr.mxu0 0.0
    %1919 = vmatpush2.msra.mxu0 0.0
    %1920 = vmatprep.subr.mxu0 0.0
    %1921 = vmatpush2.msra.mxu0 0.0
    %1922 = vmatprep.subr.mxu0 0.0
    %1923 = vmatpush2.msra.mxu0 0.0
    %1924 = vmatprep.subr.mxu0 0.0
    %1925 = vmatpush2.msra.mxu0 0.0
    %1926 = vmatprep.subr.mxu0 0.0
    %1927 = vmatpush2.msra.mxu0 0.0
    %1928 = vmatprep.subr.mxu0 0.0
    %1929 = vmatpush2.msra.mxu0 0.0
    %1930 = vmatprep.mubr.f32.mxu0 0.0
    %1931 = vmatmul.mubr.f32.gmra.mxu0 %v1861
    %v1932 = vpop.f32.mrf.mxu0
    %v1933 = vadd.f32 %v1858, %v1932
    %v1934 = vpop.f32.mrf.mxu0
    %1935 = vmatprep.mubr.f32.mxu0 0.0
    %1936 = vmatmul.mubr.f32.gmra.mxu0 %v1864
    %v1937 = vpop.f32.mrf.mxu0
    %v1938 = vadd.f32 %v1858, %v1937
    %v1939 = vpop.f32.mrf.mxu0
    %1940 = vdwg.mxu0
    %v1941 = vmax.f32 %v1933, 0.0
    %v1942 = vmax.f32 %v1938, 0.0
    %v1944 = vlaneseq
    %v1945 = vshrl.u32 %v1944, 7
    %v1946 = vsub.s32 0, %v1945
    %v1947 = vrot.slane %v1822, %v1946
    %v1950 = vsel %vm505, %v1941, 0
    %v1953 = vsel %vm505, %v1942, 0
    %1955 = vmatprep.subr.mxu0 0.0
    %1956 = vmatpush1.msra.mxu0 0.0
    %1957 = vmatprep.subr.mxu0 0.0
    %1958 = vmatpush1.msra.mxu0 0.0
    %1959 = vmatprep.subr.mxu0 0.0
    %1960 = vmatpush1.msra.mxu0 0.0
    %1961 = vmatprep.subr.mxu0 0.0
    %1962 = vmatpush1.msra.mxu0 0.0
    %1963 = vmatprep.subr.mxu0 0.0
    %1964 = vmatpush1.msra.mxu0 0.0
    %1965 = vmatprep.subr.mxu0 0.0
    %1966 = vmatpush1.msra.mxu0 0.0
    %1967 = vmatprep.subr.mxu0 0.0
    %1968 = vmatpush1.msra.mxu0 0.0
    %1969 = vmatprep.subr.mxu0 0.0
    %1970 = vmatpush1.msra.mxu0 0.0
    %1971 = vmatprep.subr.mxu0 0.0
    %1972 = vmatpush1.msra.mxu0 0.0
    %1973 = vmatprep.subr.mxu0 0.0
    %1974 = vmatpush1.msra.mxu0 0.0
    %1975 = vmatprep.subr.mxu0 0.0
    %1976 = vmatpush1.msra.mxu0 0.0
    %1977 = vmatprep.subr.mxu0 0.0
    %1978 = vmatpush1.msra.mxu0 0.0
    %1979 = vmatprep.subr.mxu0 0.0
    %1980 = vmatpush1.msra.mxu0 0.0
    %1981 = vmatprep.subr.mxu0 0.0
    %1982 = vmatpush1.msra.mxu0 0.0
    %1983 = vmatprep.subr.mxu0 0.0
    %1984 = vmatpush1.msra.mxu0 0.0
    %1985 = vmatprep.subr.mxu0 0.0
    %1986 = vmatpush1.msra.mxu0 %v1821
    %1987 = vmatprep.subr.mxu0 0.0
    %1988 = vmatpush2.msra.mxu0 0.0
    %1989 = vmatprep.subr.mxu0 0.0
    %1990 = vmatpush2.msra.mxu0 0.0
    %1991 = vmatprep.subr.mxu0 0.0
    %1992 = vmatpush2.msra.mxu0 0.0
    %1993 = vmatprep.subr.mxu0 0.0
    %1994 = vmatpush2.msra.mxu0 0.0
    %1995 = vmatprep.subr.mxu0 0.0
    %1996 = vmatpush2.msra.mxu0 0.0
    %1997 = vmatprep.subr.mxu0 0.0
    %1998 = vmatpush2.msra.mxu0 0.0
    %1999 = vmatprep.subr.mxu0 0.0
    %2000 = vmatpush2.msra.mxu0 0.0
    %2001 = vmatprep.subr.mxu0 0.0
    %2002 = vmatpush2.msra.mxu0 0.0
    %2003 = vmatprep.subr.mxu0 0.0
    %2004 = vmatpush2.msra.mxu0 0.0
    %2005 = vmatprep.subr.mxu0 0.0
    %2006 = vmatpush2.msra.mxu0 0.0
    %2007 = vmatprep.subr.mxu0 0.0
    %2008 = vmatpush2.msra.mxu0 0.0
    %2009 = vmatprep.subr.mxu0 0.0
    %2010 = vmatpush2.msra.mxu0 0.0
    %2011 = vmatprep.subr.mxu0 0.0
    %2012 = vmatpush2.msra.mxu0 0.0
    %2013 = vmatprep.subr.mxu0 0.0
    %2014 = vmatpush2.msra.mxu0 0.0
    %2015 = vmatprep.subr.mxu0 0.0
    %2016 = vmatpush2.msra.mxu0 0.0
    %2017 = vmatprep.subr.mxu0 0.0
    %2018 = vmatpush2.msra.mxu0 0.0
    %2019 = vmatprep.mubr.f32.mxu0 0.0
    %2020 = vmatmul.mubr.f32.gmra.mxu0 %v1950
    %v2021 = vpop.f32.mrf.mxu0
    %v2022 = vadd.f32 %v1947, %v2021
    %v2023 = vpop.f32.mrf.mxu0
    %2024 = vmatprep.mubr.f32.mxu0 0.0
    %2025 = vmatmul.mubr.f32.gmra.mxu0 %v1953
    %v2026 = vpop.f32.mrf.mxu0
    %v2027 = vadd.f32 %v1947, %v2026
    %v2028 = vpop.f32.mrf.mxu0
    %2029 = vdwg.mxu0
    %v2030 = vmax.f32 %v2022, 0.0
    %v2031 = vmax.f32 %v2027, 0.0
    %v2033 = vlaneseq
    %v2034 = vshrl.u32 %v2033, 7
    %v2035 = vsub.s32 0, %v2034
    %v2036 = vrot.slane %v1824, %v2035
    %v2039 = vsel %vm1726, %v2030, 0
    %v2042 = vsel %vm1726, %v2031, 0
    %v2045 = vsel %vm1730, %v1823, 0
    %2047 = vmatprep.subr.mxu0 0.0
    %2048 = vmatpush1.msra.mxu0 0.0
    %2049 = vmatprep.subr.mxu0 0.0
    %2050 = vmatpush1.msra.mxu0 0.0
    %2051 = vmatprep.subr.mxu0 0.0
    %2052 = vmatpush1.msra.mxu0 0.0
    %2053 = vmatprep.subr.mxu0 0.0
    %2054 = vmatpush1.msra.mxu0 0.0
    %2055 = vmatprep.subr.mxu0 0.0
    %2056 = vmatpush1.msra.mxu0 0.0
    %2057 = vmatprep.subr.mxu0 0.0
    %2058 = vmatpush1.msra.mxu0 0.0
    %2059 = vmatprep.subr.mxu0 0.0
    %2060 = vmatpush1.msra.mxu0 0.0
    %2061 = vmatprep.subr.mxu0 0.0
    %2062 = vmatpush1.msra.mxu0 0.0
    %2063 = vmatprep.subr.mxu0 0.0
    %2064 = vmatpush1.msra.mxu0 0.0
    %2065 = vmatprep.subr.mxu0 0.0
    %2066 = vmatpush1.msra.mxu0 0.0
    %2067 = vmatprep.subr.mxu0 0.0
    %2068 = vmatpush1.msra.mxu0 0.0
    %2069 = vmatprep.subr.mxu0 0.0
    %2070 = vmatpush1.msra.mxu0 0.0
    %2071 = vmatprep.subr.mxu0 0.0
    %2072 = vmatpush1.msra.mxu0 0.0
    %2073 = vmatprep.subr.mxu0 0.0
    %2074 = vmatpush1.msra.mxu0 0.0
    %2075 = vmatprep.subr.mxu0 0.0
    %2076 = vmatpush1.msra.mxu0 0.0
    %2077 = vmatprep.subr.mxu0 0.0
    %2078 = vmatpush1.msra.mxu0 %v2045
    %2079 = vmatprep.subr.mxu0 0.0
    %2080 = vmatpush2.msra.mxu0 0.0
    %2081 = vmatprep.subr.mxu0 0.0
    %2082 = vmatpush2.msra.mxu0 0.0
    %2083 = vmatprep.subr.mxu0 0.0
    %2084 = vmatpush2.msra.mxu0 0.0
    %2085 = vmatprep.subr.mxu0 0.0
    %2086 = vmatpush2.msra.mxu0 0.0
    %2087 = vmatprep.subr.mxu0 0.0
    %2088 = vmatpush2.msra.mxu0 0.0
    %2089 = vmatprep.subr.mxu0 0.0
    %2090 = vmatpush2.msra.mxu0 0.0
    %2091 = vmatprep.subr.mxu0 0.0
    %2092 = vmatpush2.msra.mxu0 0.0
    %2093 = vmatprep.subr.mxu0 0.0
    %2094 = vmatpush2.msra.mxu0 0.0
    %2095 = vmatprep.subr.mxu0 0.0
    %2096 = vmatpush2.msra.mxu0 0.0
    %2097 = vmatprep.subr.mxu0 0.0
    %2098 = vmatpush2.msra.mxu0 0.0
    %2099 = vmatprep.subr.mxu0 0.0
    %2100 = vmatpush2.msra.mxu0 0.0
    %2101 = vmatprep.subr.mxu0 0.0
    %2102 = vmatpush2.msra.mxu0 0.0
    %2103 = vmatprep.subr.mxu0 0.0
    %2104 = vmatpush2.msra.mxu0 0.0
    %2105 = vmatprep.subr.mxu0 0.0
    %2106 = vmatpush2.msra.mxu0 0.0
    %2107 = vmatprep.subr.mxu0 0.0
    %2108 = vmatpush2.msra.mxu0 0.0
    %2109 = vmatprep.subr.mxu0 0.0
    %2110 = vmatpush2.msra.mxu0 0.0
    %2111 = vmatprep.mubr.f32.mxu0 0.0
    %2112 = vmatmul.mubr.f32.gmra.mxu0 %v2039
    %v2113 = vpop.f32.mrf.mxu0
    %v2114 = vadd.f32 %v2036, %v2113
    %v2115 = vpop.f32.mrf.mxu0
    %2116 = vmatprep.mubr.f32.mxu0 0.0
    %2117 = vmatmul.mubr.f32.gmra.mxu0 %v2042
    %v2118 = vpop.f32.mrf.mxu0
    %v2119 = vadd.f32 %v2036, %v2118
    %v2120 = vpop.f32.mrf.mxu0
    %2121 = vdwg.mxu0
    %v2122 = vsel %vm1726, %v2114, -inf
    %2123 = vmax.xlane.f32.xlu0 %v2122
    %v2124 = vpop.xlane.xlu0 %2123
    %v2125 = vsel %vm1726, %v2119, -inf
    %2126 = vmax.xlane.f32.xlu0 %v2125
    %v2127 = vpop.xlane.xlu0 %2126
    %v2128 = vsub.f32 %v2114, %v2124
    %v2129 = vsub.f32 %v2119, %v2127
    %v2130 = vmul.f32 %v2128, 1.442695
    %v2131 = vpow.pop %v2130
    %v2132 = vmul.f32 %v2129, 1.442695
    %v2133 = vpow.pop %v2132
    %v2134 = vsel %vm1726, %v2131, 0.0
    %2135 = vadd.xlane.f32.xlu0 %v2134
    %v2136 = vpop.xlane.xlu0 %2135
    %v2137 = vsel %vm1726, %v2133, 0.0
    %2138 = vadd.xlane.f32.xlu0 %v2137
    %v2139 = vpop.xlane.xlu0 %2138
    %v2140 = vrcp.pop %v2136
    %v2141 = vmul.f32 %v2131, %v2140
    %v2142 = vrcp.pop %v2139
    %v2143 = vmul.f32 %v2133, %v2142
    %2144 = vst.msk [vmem:[%s77] sm:$0xff] %vm1726, %v2141
    %2145 = vst.msk [vmem:[%s77 + $0x8] sm:$0xff] %vm1726, %v2143
    // Predicated region
    $region166: #{tpu_custom_call.1} parent=1 // pred_check
      _
    $region167: #{tpu_custom_call.1} parent=1 // pred_check_branch
      %2147 = sbr.rel (0) target = $region169
    $region168: #{tpu_custom_call.1} parent=1 // pred_region
      %s2149 = ssub.s32 128, 128
      %2150 = vsyncadd [#allocation4], %s2149
      %s2152 = sshll.u32 [#allocation19], 4
      %s2153 = int_to_ptr.vmem [resolvable:$true] %s2152
      %2155 = dma.vmem_to_hbm [thread:$0]  %s2153, 128, %s63, [#allocation4]
    $region169: #{tpu_custom_call.1} parent=1 // pred_fallthru
      _
    // Predicated region
    $region170: #{tpu_custom_call.1} parent=1 // pred_check
      _
    $region171: #{tpu_custom_call.1} parent=1 // pred_check_branch
      %2157 = sbr.rel (0) target = $region173
    $region172: #{tpu_custom_call.1} parent=1 // pred_region
      %s2159 = ssub.s32 128, 128
      %2160 = vsyncadd [#allocation21], %s2159
      %s2162 = sshll.u32 [#allocation20], 4
      %s2163 = int_to_ptr.vmem [resolvable:$true] %s2162
      %2165 = dma.vmem_to_hbm [thread:$0]  %s2163, 128, %s65, [#allocation21]
    $region173: #{tpu_custom_call.1} parent=1 // pred_fallthru
      _
    // Predicated region
    $region174: #{tpu_custom_call.1} parent=1 // pred_check
      _
    $region175: #{tpu_custom_call.1} parent=1 // pred_check_branch
      %2167 = sbr.rel (0) target = $region177
    $region176: #{tpu_custom_call.1} parent=1 // pred_region
      %s2169 = ssub.s32 128, 128
      %2170 = vsyncadd [#allocation21], %s2169
      %s2172 = sshll.u32 [#allocation22], 4
      %s2173 = int_to_ptr.vmem [resolvable:$true] %s2172
      %2175 = dma.vmem_to_hbm [thread:$0]  %s2173, 128, %s67, [#allocation21]
    $region177: #{tpu_custom_call.1} parent=1 // pred_fallthru
      _
    // Predicated region
    $region178: #{tpu_custom_call.1} parent=1 // pred_check
      _
    $region179: #{tpu_custom_call.1} parent=1 // pred_check_branch
      %2177 = sbr.rel (0) target = $region181
    $region180: #{tpu_custom_call.1} parent=1 // pred_region
      %s2179 = ssub.s32 128, 128
      %2180 = vsyncadd [#allocation24], %s2179
      %s2182 = sshll.u32 [#allocation23], 4
      %s2183 = int_to_ptr.vmem [resolvable:$true] %s2182
      %2185 = dma.vmem_to_hbm [thread:$0]  %s2183, 128, %s69, [#allocation24]
    $region181: #{tpu_custom_call.1} parent=1 // pred_fallthru
      _
    // Predicated region
    $region182: #{tpu_custom_call.1} parent=1 // pred_check
      _
    $region183: #{tpu_custom_call.1} parent=1 // pred_check_branch
      %2187 = sbr.rel (0) target = $region185
    $region184: #{tpu_custom_call.1} parent=1 // pred_region
      %s2189 = ssub.s32 128, 128
      %2190 = vsyncadd [#allocation24], %s2189
      %s2192 = sshll.u32 [#allocation25], 4
      %s2193 = int_to_ptr.vmem [resolvable:$true] %s2192
      %2195 = dma.vmem_to_hbm [thread:$0]  %s2193, 128, %s71, [#allocation24]
    $region185: #{tpu_custom_call.1} parent=1 // pred_fallthru
      _
    // Predicated region
    $region186: #{tpu_custom_call.1} parent=1 // pred_check
      _
    $region187: #{tpu_custom_call.1} parent=1 // pred_check_branch
      %2197 = sbr.rel (0) target = $region189
    $region188: #{tpu_custom_call.1} parent=1 // pred_region
      %s2199 = ssub.s32 256, 256
      %2200 = vsyncadd [#allocation27], %s2199
      %s2201 = sshll.u32 [#allocation26], 4
      %s2202 = int_to_ptr.vmem [resolvable:$true] %s2201
      %2207 = dma.vmem_to_hbm [thread:$0]  %s2202, 256, %s73, [#allocation27], 128, 128, 8
    $region189: #{tpu_custom_call.1} parent=1 // pred_fallthru
      _
    // Predicated region
    $region190: #{tpu_custom_call.1} parent=1 // pred_check
      _
    $region191: #{tpu_custom_call.1} parent=1 // pred_check_branch
      %2209 = sbr.rel (0) target = $region193
    $region192: #{tpu_custom_call.1} parent=1 // pred_region
      _
    $region193: #{tpu_custom_call.1} parent=1 // pred_fallthru
      _
    // Predicated region
    $region194: #{tpu_custom_call.1} parent=1 // pred_check
      _
    $region195: #{tpu_custom_call.1} parent=1 // pred_check_branch
      %2211 = sbr.rel (0) target = $region197
    $region196: #{tpu_custom_call.1} parent=1 // pred_region
      _
    $region197: #{tpu_custom_call.1} parent=1 // pred_fallthru
      _
    // Predicated region
    $region198: #{tpu_custom_call.1} parent=1 // pred_check
      _
    $region199: #{tpu_custom_call.1} parent=1 // pred_check_branch
      %2213 = sbr.rel (0) target = $region201
    $region200: #{tpu_custom_call.1} parent=1 // pred_region
      %s2215 = ssub.s32 256, 256
      %2216 = vsyncadd [#allocation27], %s2215
      %s2217 = sshll.u32 [#allocation28], 4
      %s2218 = int_to_ptr.vmem [resolvable:$true] %s2217
      %2223 = dma.vmem_to_hbm [thread:$0]  %s2218, 256, %s79, [#allocation27], 128, 128, 8
    $region201: #{tpu_custom_call.1} parent=1 // pred_fallthru
      _
    // Predicated region
    $region202: #{tpu_custom_call.1} parent=1 // pred_check
      _
    $region203: #{tpu_custom_call.1} parent=1 // pred_check_branch
      %2225 = sbr.rel (0) target = $region205
    $region204: #{tpu_custom_call.1} parent=1 // pred_region
      %2226 = dma.done [#allocation4], 128
    $region205: #{tpu_custom_call.1} parent=1 // pred_fallthru
      _
    // Predicated region
    $region206: #{tpu_custom_call.1} parent=1 // pred_check
      _
    $region207: #{tpu_custom_call.1} parent=1 // pred_check_branch
      %2228 = sbr.rel (0) target = $region209
    $region208: #{tpu_custom_call.1} parent=1 // pred_region
      %2229 = dma.done [#allocation21], 128
    $region209: #{tpu_custom_call.1} parent=1 // pred_fallthru
      _
    // Predicated region
    $region210: #{tpu_custom_call.1} parent=1 // pred_check
      _
    $region211: #{tpu_custom_call.1} parent=1 // pred_check_branch
      %2231 = sbr.rel (0) target = $region213
    $region212: #{tpu_custom_call.1} parent=1 // pred_region
      %2232 = dma.done [#allocation21], 128
    $region213: #{tpu_custom_call.1} parent=1 // pred_fallthru
      _
    // Predicated region
    $region214: #{tpu_custom_call.1} parent=1 // pred_check
      _
    $region215: #{tpu_custom_call.1} parent=1 // pred_check_branch
      %2234 = sbr.rel (0) target = $region217
    $region216: #{tpu_custom_call.1} parent=1 // pred_region
      %2235 = dma.done [#allocation24], 128
    $region217: #{tpu_custom_call.1} parent=1 // pred_fallthru
      _
    // Predicated region
    $region218: #{tpu_custom_call.1} parent=1 // pred_check
      _
    $region219: #{tpu_custom_call.1} parent=1 // pred_check_branch
      %2237 = sbr.rel (0) target = $region221
    $region220: #{tpu_custom_call.1} parent=1 // pred_region
      %2238 = dma.done [#allocation24], 128
    $region221: #{tpu_custom_call.1} parent=1 // pred_fallthru
      _
    // Predicated region
    $region222: #{tpu_custom_call.1} parent=1 // pred_check
      _
    $region223: #{tpu_custom_call.1} parent=1 // pred_check_branch
      %2240 = sbr.rel (0) target = $region225
    $region224: #{tpu_custom_call.1} parent=1 // pred_region
      %2241 = dma.done [#allocation27], 256
    $region225: #{tpu_custom_call.1} parent=1 // pred_fallthru
      _
    // Predicated region
    $region226: #{tpu_custom_call.1} parent=1 // pred_check
      _
    $region227: #{tpu_custom_call.1} parent=1 // pred_check_branch
      %2243 = sbr.rel (0) target = $region229
    $region228: #{tpu_custom_call.1} parent=1 // pred_region
      _
    $region229: #{tpu_custom_call.1} parent=1 // pred_fallthru
      _
    // Predicated region
    $region230: #{tpu_custom_call.1} parent=1 // pred_check
      _
    $region231: #{tpu_custom_call.1} parent=1 // pred_check_branch
      %2245 = sbr.rel (0) target = $region233
    $region232: #{tpu_custom_call.1} parent=1 // pred_region
      _
    $region233: #{tpu_custom_call.1} parent=1 // pred_fallthru
      _
    // Predicated region
    $region234: #{tpu_custom_call.1} parent=1 // pred_check
      _
    $region235: #{tpu_custom_call.1} parent=1 // pred_check_branch
      %2247 = sbr.rel (0) target = $region237
    $region236: #{tpu_custom_call.1} parent=1 // pred_region
      %2248 = dma.done [#allocation27], 256
    $region237: #{tpu_custom_call.1} parent=1 // pred_fallthru
      _
    %2249 = vsyncpa [#allocation3], 1
    %2250 = vsyncpa [#allocation6], 1
    %2251 = vsyncpa [#allocation9], 1
    %2252 = vsyncpa [#allocation12], 1
    %2253 = vsyncpa [#allocation15], 1
    %2254 = vsyncpa [#allocation18], 1
    %2255 = vsyncpa [#allocation4], 1
    %2256 = vsyncpa [#allocation21], 1
    %2257 = vsyncpa [#allocation24], 1
    %2258 = vsyncpa [#allocation27], 1

</llo_original>
